<compile_context>
chip_gen: v7x
topology: tpu7x:2x2x1
jax: 0.10.0
libtpu: 0.0.40
codegen_flags: <defaults>
</compile_context>

<pallas_src>
import jax
import jax.numpy as jnp
from jax import lax
from jax.experimental import pallas as pl
from jax.experimental.pallas import tpu as pltpu

N_CLASSES = 5
OUT_PAD = 128     # lane-dense padded output width


def lstm_learner_kernel(len_ref, x_ref, wih_ref, whh_ref, b_ref,
                        w1_ref, b1_ref, w2_ref, b2_ref,
                        out_ref, xg_sc):
    """len_ref: (B,1) i32     x_ref: (T*B, D) bf16 (time-major, flattened)
       wih_ref: (D,4H) bf16   whh_ref: (H,4H) bf16   b_ref: (1,4H) f32
       w1_ref: (H,MLP) bf16   b1_ref: (1,MLP) f32
       w2_ref: (MLP,OUT_PAD) bf16   b2_ref: (1,OUT_PAD) f32
       out_ref: (B,OUT_PAD) f32     xg_sc: (T*B,4H) f32 scratch."""
    TB, D = x_ref.shape
    B = len_ref.shape[0]
    T = TB // B
    H = whh_ref.shape[0]

    # (1) Hoisted input projection: one (T*B, D) x (D, 4H) matmul, LSTM bias folded in.
    xg_sc[...] = (jnp.dot(x_ref[...], wih_ref[...],
                          preferred_element_type=jnp.float32)
                  + b_ref[...])

    # Loop-invariant loads / broadcasts, hoisted once (JAX does not CSE broadcast_in_dim).
    whh = whh_ref[...]                                       # (H, 4H) bf16
    lens_b = jnp.broadcast_to(len_ref[...], (B, H))          # (B, H)  int32

    # (2) Serial recurrence: h/c carried in vregs, loop fully unrolled (T small & static).
    def step(t, carry):
        h, c = carry                                         # (B, H) f32 each
        row = pl.multiple_of(t * B, B)
        gates = (jnp.dot(h.astype(whh.dtype), whh,
                         preferred_element_type=jnp.float32)
                 + xg_sc[pl.ds(row, B), :])                  # (B, 4H) f32
        i_g = jax.nn.sigmoid(gates[:, 0:H])
        f_g = jax.nn.sigmoid(gates[:, H:2 * H])
        g_g = jnp.tanh(gates[:, 2 * H:3 * H])
        o_g = jax.nn.sigmoid(gates[:, 3 * H:4 * H])
        c_new = f_g * c + i_g * g_g
        h_new = o_g * jnp.tanh(c_new)
        # packed-sequence semantics: freeze h/c for sequences that already ended.
        live = lens_b > t
        return jnp.where(live, h_new, h), jnp.where(live, c_new, c)

    h0 = jnp.zeros((B, H), jnp.float32)
    c0 = jnp.zeros((B, H), jnp.float32)
    h_final, _ = lax.fori_loop(0, T, step, (h0, c0), unroll=True)     # == h_n[-1]

    # (3) MLP head: fc1 -> ReLU -> (dropout = identity) -> fc2 (lane-dense padded output).
    z1 = (jnp.dot(h_final.astype(w1_ref.dtype), w1_ref[...],
                  preferred_element_type=jnp.float32) + b1_ref[...])
    z1 = jnp.maximum(z1, 0.0)                                         # ReLU
    # TODO(synk): nn.Dropout(0.5) treated as identity (eval-mode / deterministic semantics).
    out_ref[...] = (jnp.dot(z1.astype(w2_ref.dtype), w2_ref[...],
                            preferred_element_type=jnp.float32) + b2_ref[...])


def lstm_learner_forward(x_padded, phrase_lengths, params):
    emb = params["embedding"]                                   # (V, D) f32
    B, T = x_padded.shape
    H = params["w_hh_t"].shape[0]

    # Glue: embedding gather (frozen table, padding_idx row is zero) + time-major layout.
    x_emb = jnp.take(emb, x_padded, axis=0)                     # (B, T, D)
    x_tbd = jnp.transpose(x_emb, (1, 0, 2))                     # (T, B, D)
    x_flat = x_tbd.reshape(T * B, -1).astype(jnp.bfloat16)      # (T*B, D) bf16

    lens = phrase_lengths.astype(jnp.int32).reshape(B, 1)       # (B, 1)

    vmem = pl.BlockSpec(memory_space=pltpu.MemorySpace.VMEM)
    out_padded = pl.pallas_call(
        lstm_learner_kernel,
        out_shape=jax.ShapeDtypeStruct((B, OUT_PAD), jnp.float32),
        in_specs=[vmem] * 9,
        out_specs=vmem,
        scratch_shapes=[pltpu.VMEM((T * B, 4 * H), jnp.float32)],
    )(lens, x_flat,
      params["w_ih_t"], params["w_hh_t"], params["b_lstm"],
      params["w1_t"], params["b1"], params["w2_t"], params["b2"])
    return out_padded[:, :N_CLASSES]                            # (B, 5)


def init_params(key, vocab=50, d=128, h=128, mlp=128):
    ks = jax.random.split(key, 8)
    emb = jax.random.normal(ks[0], (vocab, d), jnp.float32) * 0.1
    emb = emb.at[0].set(0.0)                                    # PAD row (padding_idx=0)
    # PyTorch nn.LSTM params: weight_ih (4H, D), weight_hh (4H, H), bias_ih/bias_hh (4H,).
    w_ih = jax.random.normal(ks[1], (4 * h, d), jnp.float32) * 0.05
    w_hh = jax.random.normal(ks[2], (4 * h, h), jnp.float32) * 0.05
    b_ih = jax.random.normal(ks[3], (4 * h,), jnp.float32) * 0.05
    b_hh = jax.random.normal(ks[4], (4 * h,), jnp.float32) * 0.05
    # fc1: (MLP, H), fc2: (5, MLP)
    w1 = jax.random.normal(ks[5], (mlp, h), jnp.float32) * 0.05
    b1 = jnp.zeros((mlp,), jnp.float32)
    w2 = jax.random.normal(ks[6], (N_CLASSES, mlp), jnp.float32) * 0.05
    b2 = jnp.zeros((N_CLASSES,), jnp.float32)

    # Lane-dense fc2: zero-pad the 5-wide output dim to OUT_PAD columns.
    w2_t_pad = jnp.zeros((mlp, OUT_PAD), jnp.float32).at[:, :N_CLASSES].set(w2.T)
    b2_pad = jnp.zeros((1, OUT_PAD), jnp.float32).at[0, :N_CLASSES].set(b2)

    bf16 = jnp.bfloat16
    return {
        "embedding": emb,                              # f32, gathered in wrapper
        "w_ih_t": w_ih.T.astype(bf16),                 # (D, 4H)
        "w_hh_t": w_hh.T.astype(bf16),                 # (H, 4H)
        "b_lstm": (b_ih + b_hh)[None, :],              # (1, 4H) f32
        "w1_t": w1.T.astype(bf16),                     # (H, MLP)
        "b1": b1[None, :],                             # (1, MLP) f32
        "w2_t": w2_t_pad.astype(bf16),                 # (MLP, OUT_PAD)
        "b2": b2_pad,                                  # (1, OUT_PAD) f32
    }


if __name__ == "__main__":
    key = jax.random.PRNGKey(0)
    k_param, k_tok = jax.random.split(key)

    VOCAB, D, H, MLP = 50, 128, 128, 128
    B, T = 8, 8

    params = init_params(k_param, vocab=VOCAB, d=D, h=H, mlp=MLP)

    phrase_lengths = jnp.array([8, 5, 3, 8, 1, 6, 7, 2], dtype=jnp.int32)
    tokens = jax.random.randint(k_tok, (B, T), 1, VOCAB, dtype=jnp.int32)
    pad_mask = jnp.arange(T)[None, :] < phrase_lengths[:, None]
    x_padded = jnp.where(pad_mask, tokens, 0)                   # 0 == PAD index

    out = lstm_learner_forward(x_padded, phrase_lengths, params)
    out = jax.block_until_ready(out)
    assert out.shape == (B, N_CLASSES) and out.dtype == jnp.float32
    print("KERNEL_OK")
</pallas_src>

<mosaic_0001>
module attributes {stable_mosaic.version = 11 : i64} {
  func.func @lstm_learner_kernel(%arg0: memref<8x1xi32, #tpu.memory_space<vmem>>, %arg1: memref<64x128xbf16, #tpu.memory_space<vmem>>, %arg2: memref<128x512xbf16, #tpu.memory_space<vmem>>, %arg3: memref<128x512xbf16, #tpu.memory_space<vmem>>, %arg4: memref<1x512xf32, #tpu.memory_space<vmem>>, %arg5: memref<128x128xbf16, #tpu.memory_space<vmem>>, %arg6: memref<1x128xf32, #tpu.memory_space<vmem>>, %arg7: memref<128x128xbf16, #tpu.memory_space<vmem>>, %arg8: memref<1x128xf32, #tpu.memory_space<vmem>>, %arg9: memref<8x128xf32, #tpu.memory_space<vmem>>, %arg10: memref<64x512xf32, #tpu.memory_space<vmem>>) attributes {dimension_semantics = [], scalar_prefetch = 0 : i64, scratch_operands = 1 : i64, tpu.core_type = #tpu.core_type<tc>} {
    %c0 = arith.constant 0 : index
    %c0_0 = arith.constant 0 : index
    %0 = vector.load %arg1[%c0, %c0_0] : memref<64x128xbf16, #tpu.memory_space<vmem>>, vector<64x128xbf16>
    %c0_1 = arith.constant 0 : index
    %c0_2 = arith.constant 0 : index
    %1 = vector.load %arg2[%c0_1, %c0_2] : memref<128x512xbf16, #tpu.memory_space<vmem>>, vector<128x512xbf16>
    %cst = arith.constant dense<0.000000e+00> : vector<64x512xf32>
    %2 = tpu.matmul %0, %1, %cst {dimension_numbers = #tpu.dot_dimension_numbers<[1], [0], [0], [1], [0, 0, 1, 1], [], []>} : vector<64x128xbf16>, vector<128x512xbf16>, vector<64x512xf32> -> vector<64x512xf32>
    %c0_3 = arith.constant 0 : index
    %c0_4 = arith.constant 0 : index
    %3 = vector.load %arg4[%c0_3, %c0_4] : memref<1x512xf32, #tpu.memory_space<vmem>>, vector<1x512xf32>
    %4 = vector.broadcast %3 : vector<1x512xf32> to vector<64x512xf32>
    %5 = arith.addf %2, %4 : vector<64x512xf32>
    %c0_5 = arith.constant 0 : index
    %c0_6 = arith.constant 0 : index
    %6 = vector.load %arg10[%c0_5, %c0_6] : memref<64x512xf32, #tpu.memory_space<vmem>>, vector<64x512xf32>
    tpu.vector_store %arg10[%c0_5, %c0_6], %5 {strides = array<i32>} : memref<64x512xf32, #tpu.memory_space<vmem>>, vector<64x512xf32>,
    %c0_7 = arith.constant 0 : index
    %c0_8 = arith.constant 0 : index
    %7 = vector.load %arg3[%c0_7, %c0_8] : memref<128x512xbf16, #tpu.memory_space<vmem>>, vector<128x512xbf16>
    %c0_9 = arith.constant 0 : index
    %c0_10 = arith.constant 0 : index
    %8 = vector.load %arg0[%c0_9, %c0_10] : memref<8x1xi32, #tpu.memory_space<vmem>>, vector<8x1xi32>
    %9 = vector.shape_cast %8 : vector<8x1xi32> to vector<8x1xi32>
    %10 = vector.broadcast %9 : vector<8x1xi32> to vector<8x128xi32>
    %cst_11 = arith.constant 0.000000e+00 : f32
    %11 = vector.broadcast %cst_11 : f32 to vector<8x128xf32>
    %cst_12 = arith.constant 0.000000e+00 : f32
    %12 = vector.broadcast %cst_12 : f32 to vector<8x128xf32>
    %c0_i32 = arith.constant 0 : i32
    %c8_i32 = arith.constant 8 : i32
    %13 = arith.muli %c0_i32, %c8_i32 : i32
    %14 = tpu.assume_multiple %13, 8 : i32
    %15 = arith.truncf %11 : vector<8x128xf32> to vector<8x128xbf16>
    %cst_13 = arith.constant dense<0.000000e+00> : vector<8x512xf32>
    %16 = tpu.matmul %15, %7, %cst_13 {dimension_numbers = #tpu.dot_dimension_numbers<[1], [0], [0], [1], [0, 0, 1, 1], [], []>} : vector<8x128xbf16>, vector<128x512xbf16>, vector<8x512xf32> -> vector<8x512xf32>
    %17 = arith.index_cast %14 : i32 to index
    %c0_14 = arith.constant 0 : index
    %18 = vector.load %arg10[%17, %c0_14] : memref<64x512xf32, #tpu.memory_space<vmem>>, vector<8x512xf32>
    %19 = arith.addf %16, %18 : vector<8x512xf32>
    %20 = vector.extract_strided_slice %19 {offsets = [0, 0], sizes = [8, 128], strides = [1, 1]} : vector<8x512xf32> to vector<8x128xf32>
    %21 = arith.negf %20 : vector<8x128xf32>
    %22 = math.exp %21 : vector<8x128xf32>
    %cst_15 = arith.constant 1.000000e+00 : f32
    %23 = vector.broadcast %cst_15 : f32 to vector<8x128xf32>
    %24 = arith.addf %23, %22 : vector<8x128xf32>
    %25 = arith.divf %23, %24 : vector<8x128xf32>
    %26 = vector.extract_strided_slice %19 {offsets = [0, 128], sizes = [8, 128], strides = [1, 1]} : vector<8x512xf32> to vector<8x128xf32>
    %27 = arith.negf %26 : vector<8x128xf32>
    %28 = math.exp %27 : vector<8x128xf32>
    %cst_16 = arith.constant 1.000000e+00 : f32
    %29 = vector.broadcast %cst_16 : f32 to vector<8x128xf32>
    %30 = arith.addf %29, %28 : vector<8x128xf32>
    %31 = arith.divf %29, %30 : vector<8x128xf32>
    %32 = vector.extract_strided_slice %19 {offsets = [0, 256], sizes = [8, 128], strides = [1, 1]} : vector<8x512xf32> to vector<8x128xf32>
    %33 = math.tanh %32 : vector<8x128xf32>
    %34 = vector.extract_strided_slice %19 {offsets = [0, 384], sizes = [8, 128], strides = [1, 1]} : vector<8x512xf32> to vector<8x128xf32>
    %35 = arith.negf %34 : vector<8x128xf32>
    %36 = math.exp %35 : vector<8x128xf32>
    %cst_17 = arith.constant 1.000000e+00 : f32
    %37 = vector.broadcast %cst_17 : f32 to vector<8x128xf32>
    %38 = arith.addf %37, %36 : vector<8x128xf32>
    %39 = arith.divf %37, %38 : vector<8x128xf32>
    %40 = arith.mulf %31, %12 : vector<8x128xf32>
    %41 = arith.mulf %25, %33 : vector<8x128xf32>
    %42 = arith.addf %40, %41 : vector<8x128xf32>
    %43 = math.tanh %42 : vector<8x128xf32>
    %44 = arith.mulf %39, %43 : vector<8x128xf32>
    %45 = vector.broadcast %c0_i32 : i32 to vector<8x128xi32>
    %46 = arith.cmpi sgt, %10, %45 : vector<8x128xi32>
    %47 = arith.select %46, %44, %11 : vector<8x128xi1>, vector<8x128xf32>
    %48 = arith.select %46, %42, %12 : vector<8x128xi1>, vector<8x128xf32>
    %c1_i32 = arith.constant 1 : i32
    %c8_i32_18 = arith.constant 8 : i32
    %49 = arith.muli %c1_i32, %c8_i32_18 : i32
    %50 = tpu.assume_multiple %49, 8 : i32
    %51 = arith.truncf %47 : vector<8x128xf32> to vector<8x128xbf16>
    %cst_19 = arith.constant dense<0.000000e+00> : vector<8x512xf32>
    %52 = tpu.matmul %51, %7, %cst_19 {dimension_numbers = #tpu.dot_dimension_numbers<[1], [0], [0], [1], [0, 0, 1, 1], [], []>} : vector<8x128xbf16>, vector<128x512xbf16>, vector<8x512xf32> -> vector<8x512xf32>
    %53 = arith.index_cast %50 : i32 to index
    %c0_20 = arith.constant 0 : index
    %54 = vector.load %arg10[%53, %c0_20] : memref<64x512xf32, #tpu.memory_space<vmem>>, vector<8x512xf32>
    %55 = arith.addf %52, %54 : vector<8x512xf32>
    %56 = vector.extract_strided_slice %55 {offsets = [0, 0], sizes = [8, 128], strides = [1, 1]} : vector<8x512xf32> to vector<8x128xf32>
    %57 = arith.negf %56 : vector<8x128xf32>
    %58 = math.exp %57 : vector<8x128xf32>
    %cst_21 = arith.constant 1.000000e+00 : f32
    %59 = vector.broadcast %cst_21 : f32 to vector<8x128xf32>
    %60 = arith.addf %59, %58 : vector<8x128xf32>
    %61 = arith.divf %59, %60 : vector<8x128xf32>
    %62 = vector.extract_strided_slice %55 {offsets = [0, 128], sizes = [8, 128], strides = [1, 1]} : vector<8x512xf32> to vector<8x128xf32>
    %63 = arith.negf %62 : vector<8x128xf32>
    %64 = math.exp %63 : vector<8x128xf32>
    %cst_22 = arith.constant 1.000000e+00 : f32
    %65 = vector.broadcast %cst_22 : f32 to vector<8x128xf32>
    %66 = arith.addf %65, %64 : vector<8x128xf32>
    %67 = arith.divf %65, %66 : vector<8x128xf32>
    %68 = vector.extract_strided_slice %55 {offsets = [0, 256], sizes = [8, 128], strides = [1, 1]} : vector<8x512xf32> to vector<8x128xf32>
    %69 = math.tanh %68 : vector<8x128xf32>
    %70 = vector.extract_strided_slice %55 {offsets = [0, 384], sizes = [8, 128], strides = [1, 1]} : vector<8x512xf32> to vector<8x128xf32>
    %71 = arith.negf %70 : vector<8x128xf32>
    %72 = math.exp %71 : vector<8x128xf32>
    %cst_23 = arith.constant 1.000000e+00 : f32
    %73 = vector.broadcast %cst_23 : f32 to vector<8x128xf32>
    %74 = arith.addf %73, %72 : vector<8x128xf32>
    %75 = arith.divf %73, %74 : vector<8x128xf32>
    %76 = arith.mulf %67, %48 : vector<8x128xf32>
    %77 = arith.mulf %61, %69 : vector<8x128xf32>
    %78 = arith.addf %76, %77 : vector<8x128xf32>
    %79 = math.tanh %78 : vector<8x128xf32>
    %80 = arith.mulf %75, %79 : vector<8x128xf32>
    %81 = vector.broadcast %c1_i32 : i32 to vector<8x128xi32>
    %82 = arith.cmpi sgt, %10, %81 : vector<8x128xi32>
    %83 = arith.select %82, %80, %47 : vector<8x128xi1>, vector<8x128xf32>
    %84 = arith.select %82, %78, %48 : vector<8x128xi1>, vector<8x128xf32>
    %c2_i32 = arith.constant 2 : i32
    %c8_i32_24 = arith.constant 8 : i32
    %85 = arith.muli %c2_i32, %c8_i32_24 : i32
    %86 = tpu.assume_multiple %85, 8 : i32
    %87 = arith.truncf %83 : vector<8x128xf32> to vector<8x128xbf16>
    %cst_25 = arith.constant dense<0.000000e+00> : vector<8x512xf32>
    %88 = tpu.matmul %87, %7, %cst_25 {dimension_numbers = #tpu.dot_dimension_numbers<[1], [0], [0], [1], [0, 0, 1, 1], [], []>} : vector<8x128xbf16>, vector<128x512xbf16>, vector<8x512xf32> -> vector<8x512xf32>
    %89 = arith.index_cast %86 : i32 to index
    %c0_26 = arith.constant 0 : index
    %90 = vector.load %arg10[%89, %c0_26] : memref<64x512xf32, #tpu.memory_space<vmem>>, vector<8x512xf32>
    %91 = arith.addf %88, %90 : vector<8x512xf32>
    %92 = vector.extract_strided_slice %91 {offsets = [0, 0], sizes = [8, 128], strides = [1, 1]} : vector<8x512xf32> to vector<8x128xf32>
    %93 = arith.negf %92 : vector<8x128xf32>
    %94 = math.exp %93 : vector<8x128xf32>
    %cst_27 = arith.constant 1.000000e+00 : f32
    %95 = vector.broadcast %cst_27 : f32 to vector<8x128xf32>
    %96 = arith.addf %95, %94 : vector<8x128xf32>
    %97 = arith.divf %95, %96 : vector<8x128xf32>
    %98 = vector.extract_strided_slice %91 {offsets = [0, 128], sizes = [8, 128], strides = [1, 1]} : vector<8x512xf32> to vector<8x128xf32>
    %99 = arith.negf %98 : vector<8x128xf32>
    %100 = math.exp %99 : vector<8x128xf32>
    %cst_28 = arith.constant 1.000000e+00 : f32
    %101 = vector.broadcast %cst_28 : f32 to vector<8x128xf32>
    %102 = arith.addf %101, %100 : vector<8x128xf32>
    %103 = arith.divf %101, %102 : vector<8x128xf32>
    %104 = vector.extract_strided_slice %91 {offsets = [0, 256], sizes = [8, 128], strides = [1, 1]} : vector<8x512xf32> to vector<8x128xf32>
    %105 = math.tanh %104 : vector<8x128xf32>
    %106 = vector.extract_strided_slice %91 {offsets = [0, 384], sizes = [8, 128], strides = [1, 1]} : vector<8x512xf32> to vector<8x128xf32>
    %107 = arith.negf %106 : vector<8x128xf32>
    %108 = math.exp %107 : vector<8x128xf32>
    %cst_29 = arith.constant 1.000000e+00 : f32
    %109 = vector.broadcast %cst_29 : f32 to vector<8x128xf32>
    %110 = arith.addf %109, %108 : vector<8x128xf32>
    %111 = arith.divf %109, %110 : vector<8x128xf32>
    %112 = arith.mulf %103, %84 : vector<8x128xf32>
    %113 = arith.mulf %97, %105 : vector<8x128xf32>
    %114 = arith.addf %112, %113 : vector<8x128xf32>
    %115 = math.tanh %114 : vector<8x128xf32>
    %116 = arith.mulf %111, %115 : vector<8x128xf32>
    %117 = vector.broadcast %c2_i32 : i32 to vector<8x128xi32>
    %118 = arith.cmpi sgt, %10, %117 : vector<8x128xi32>
    %119 = arith.select %118, %116, %83 : vector<8x128xi1>, vector<8x128xf32>
    %120 = arith.select %118, %114, %84 : vector<8x128xi1>, vector<8x128xf32>
    %c3_i32 = arith.constant 3 : i32
    %c8_i32_30 = arith.constant 8 : i32
    %121 = arith.muli %c3_i32, %c8_i32_30 : i32
    %122 = tpu.assume_multiple %121, 8 : i32
    %123 = arith.truncf %119 : vector<8x128xf32> to vector<8x128xbf16>
    %cst_31 = arith.constant dense<0.000000e+00> : vector<8x512xf32>
    %124 = tpu.matmul %123, %7, %cst_31 {dimension_numbers = #tpu.dot_dimension_numbers<[1], [0], [0], [1], [0, 0, 1, 1], [], []>} : vector<8x128xbf16>, vector<128x512xbf16>, vector<8x512xf32> -> vector<8x512xf32>
    %125 = arith.index_cast %122 : i32 to index
    %c0_32 = arith.constant 0 : index
    %126 = vector.load %arg10[%125, %c0_32] : memref<64x512xf32, #tpu.memory_space<vmem>>, vector<8x512xf32>
    %127 = arith.addf %124, %126 : vector<8x512xf32>
    %128 = vector.extract_strided_slice %127 {offsets = [0, 0], sizes = [8, 128], strides = [1, 1]} : vector<8x512xf32> to vector<8x128xf32>
    %129 = arith.negf %128 : vector<8x128xf32>
    %130 = math.exp %129 : vector<8x128xf32>
    %cst_33 = arith.constant 1.000000e+00 : f32
    %131 = vector.broadcast %cst_33 : f32 to vector<8x128xf32>
    %132 = arith.addf %131, %130 : vector<8x128xf32>
    %133 = arith.divf %131, %132 : vector<8x128xf32>
    %134 = vector.extract_strided_slice %127 {offsets = [0, 128], sizes = [8, 128], strides = [1, 1]} : vector<8x512xf32> to vector<8x128xf32>
    %135 = arith.negf %134 : vector<8x128xf32>
    %136 = math.exp %135 : vector<8x128xf32>
    %cst_34 = arith.constant 1.000000e+00 : f32
    %137 = vector.broadcast %cst_34 : f32 to vector<8x128xf32>
    %138 = arith.addf %137, %136 : vector<8x128xf32>
    %139 = arith.divf %137, %138 : vector<8x128xf32>
    %140 = vector.extract_strided_slice %127 {offsets = [0, 256], sizes = [8, 128], strides = [1, 1]} : vector<8x512xf32> to vector<8x128xf32>
    %141 = math.tanh %140 : vector<8x128xf32>
    %142 = vector.extract_strided_slice %127 {offsets = [0, 384], sizes = [8, 128], strides = [1, 1]} : vector<8x512xf32> to vector<8x128xf32>
    %143 = arith.negf %142 : vector<8x128xf32>
    %144 = math.exp %143 : vector<8x128xf32>
    %cst_35 = arith.constant 1.000000e+00 : f32
    %145 = vector.broadcast %cst_35 : f32 to vector<8x128xf32>
    %146 = arith.addf %145, %144 : vector<8x128xf32>
    %147 = arith.divf %145, %146 : vector<8x128xf32>
    %148 = arith.mulf %139, %120 : vector<8x128xf32>
    %149 = arith.mulf %133, %141 : vector<8x128xf32>
    %150 = arith.addf %148, %149 : vector<8x128xf32>
    %151 = math.tanh %150 : vector<8x128xf32>
    %152 = arith.mulf %147, %151 : vector<8x128xf32>
    %153 = vector.broadcast %c3_i32 : i32 to vector<8x128xi32>
    %154 = arith.cmpi sgt, %10, %153 : vector<8x128xi32>
    %155 = arith.select %154, %152, %119 : vector<8x128xi1>, vector<8x128xf32>
    %156 = arith.select %154, %150, %120 : vector<8x128xi1>, vector<8x128xf32>
    %c4_i32 = arith.constant 4 : i32
    %c8_i32_36 = arith.constant 8 : i32
    %157 = arith.muli %c4_i32, %c8_i32_36 : i32
    %158 = tpu.assume_multiple %157, 8 : i32
    %159 = arith.truncf %155 : vector<8x128xf32> to vector<8x128xbf16>
    %cst_37 = arith.constant dense<0.000000e+00> : vector<8x512xf32>
    %160 = tpu.matmul %159, %7, %cst_37 {dimension_numbers = #tpu.dot_dimension_numbers<[1], [0], [0], [1], [0, 0, 1, 1], [], []>} : vector<8x128xbf16>, vector<128x512xbf16>, vector<8x512xf32> -> vector<8x512xf32>
    %161 = arith.index_cast %158 : i32 to index
    %c0_38 = arith.constant 0 : index
    %162 = vector.load %arg10[%161, %c0_38] : memref<64x512xf32, #tpu.memory_space<vmem>>, vector<8x512xf32>
    %163 = arith.addf %160, %162 : vector<8x512xf32>
    %164 = vector.extract_strided_slice %163 {offsets = [0, 0], sizes = [8, 128], strides = [1, 1]} : vector<8x512xf32> to vector<8x128xf32>
    %165 = arith.negf %164 : vector<8x128xf32>
    %166 = math.exp %165 : vector<8x128xf32>
    %cst_39 = arith.constant 1.000000e+00 : f32
    %167 = vector.broadcast %cst_39 : f32 to vector<8x128xf32>
    %168 = arith.addf %167, %166 : vector<8x128xf32>
    %169 = arith.divf %167, %168 : vector<8x128xf32>
    %170 = vector.extract_strided_slice %163 {offsets = [0, 128], sizes = [8, 128], strides = [1, 1]} : vector<8x512xf32> to vector<8x128xf32>
    %171 = arith.negf %170 : vector<8x128xf32>
    %172 = math.exp %171 : vector<8x128xf32>
    %cst_40 = arith.constant 1.000000e+00 : f32
    %173 = vector.broadcast %cst_40 : f32 to vector<8x128xf32>
    %174 = arith.addf %173, %172 : vector<8x128xf32>
    %175 = arith.divf %173, %174 : vector<8x128xf32>
    %176 = vector.extract_strided_slice %163 {offsets = [0, 256], sizes = [8, 128], strides = [1, 1]} : vector<8x512xf32> to vector<8x128xf32>
    %177 = math.tanh %176 : vector<8x128xf32>
    %178 = vector.extract_strided_slice %163 {offsets = [0, 384], sizes = [8, 128], strides = [1, 1]} : vector<8x512xf32> to vector<8x128xf32>
    %179 = arith.negf %178 : vector<8x128xf32>
    %180 = math.exp %179 : vector<8x128xf32>
    %cst_41 = arith.constant 1.000000e+00 : f32
    %181 = vector.broadcast %cst_41 : f32 to vector<8x128xf32>
    %182 = arith.addf %181, %180 : vector<8x128xf32>
    %183 = arith.divf %181, %182 : vector<8x128xf32>
    %184 = arith.mulf %175, %156 : vector<8x128xf32>
    %185 = arith.mulf %169, %177 : vector<8x128xf32>
    %186 = arith.addf %184, %185 : vector<8x128xf32>
    %187 = math.tanh %186 : vector<8x128xf32>
    %188 = arith.mulf %183, %187 : vector<8x128xf32>
    %189 = vector.broadcast %c4_i32 : i32 to vector<8x128xi32>
    %190 = arith.cmpi sgt, %10, %189 : vector<8x128xi32>
    %191 = arith.select %190, %188, %155 : vector<8x128xi1>, vector<8x128xf32>
    %192 = arith.select %190, %186, %156 : vector<8x128xi1>, vector<8x128xf32>
    %c5_i32 = arith.constant 5 : i32
    %c8_i32_42 = arith.constant 8 : i32
    %193 = arith.muli %c5_i32, %c8_i32_42 : i32
    %194 = tpu.assume_multiple %193, 8 : i32
    %195 = arith.truncf %191 : vector<8x128xf32> to vector<8x128xbf16>
    %cst_43 = arith.constant dense<0.000000e+00> : vector<8x512xf32>
    %196 = tpu.matmul %195, %7, %cst_43 {dimension_numbers = #tpu.dot_dimension_numbers<[1], [0], [0], [1], [0, 0, 1, 1], [], []>} : vector<8x128xbf16>, vector<128x512xbf16>, vector<8x512xf32> -> vector<8x512xf32>
    %197 = arith.index_cast %194 : i32 to index
    %c0_44 = arith.constant 0 : index
    %198 = vector.load %arg10[%197, %c0_44] : memref<64x512xf32, #tpu.memory_space<vmem>>, vector<8x512xf32>
    %199 = arith.addf %196, %198 : vector<8x512xf32>
    %200 = vector.extract_strided_slice %199 {offsets = [0, 0], sizes = [8, 128], strides = [1, 1]} : vector<8x512xf32> to vector<8x128xf32>
    %201 = arith.negf %200 : vector<8x128xf32>
    %202 = math.exp %201 : vector<8x128xf32>
    %cst_45 = arith.constant 1.000000e+00 : f32
    %203 = vector.broadcast %cst_45 : f32 to vector<8x128xf32>
    %204 = arith.addf %203, %202 : vector<8x128xf32>
    %205 = arith.divf %203, %204 : vector<8x128xf32>
    %206 = vector.extract_strided_slice %199 {offsets = [0, 128], sizes = [8, 128], strides = [1, 1]} : vector<8x512xf32> to vector<8x128xf32>
    %207 = arith.negf %206 : vector<8x128xf32>
    %208 = math.exp %207 : vector<8x128xf32>
    %cst_46 = arith.constant 1.000000e+00 : f32
    %209 = vector.broadcast %cst_46 : f32 to vector<8x128xf32>
    %210 = arith.addf %209, %208 : vector<8x128xf32>
    %211 = arith.divf %209, %210 : vector<8x128xf32>
    %212 = vector.extract_strided_slice %199 {offsets = [0, 256], sizes = [8, 128], strides = [1, 1]} : vector<8x512xf32> to vector<8x128xf32>
    %213 = math.tanh %212 : vector<8x128xf32>
    %214 = vector.extract_strided_slice %199 {offsets = [0, 384], sizes = [8, 128], strides = [1, 1]} : vector<8x512xf32> to vector<8x128xf32>
    %215 = arith.negf %214 : vector<8x128xf32>
    %216 = math.exp %215 : vector<8x128xf32>
    %cst_47 = arith.constant 1.000000e+00 : f32
    %217 = vector.broadcast %cst_47 : f32 to vector<8x128xf32>
    %218 = arith.addf %217, %216 : vector<8x128xf32>
    %219 = arith.divf %217, %218 : vector<8x128xf32>
    %220 = arith.mulf %211, %192 : vector<8x128xf32>
    %221 = arith.mulf %205, %213 : vector<8x128xf32>
    %222 = arith.addf %220, %221 : vector<8x128xf32>
    %223 = math.tanh %222 : vector<8x128xf32>
    %224 = arith.mulf %219, %223 : vector<8x128xf32>
    %225 = vector.broadcast %c5_i32 : i32 to vector<8x128xi32>
    %226 = arith.cmpi sgt, %10, %225 : vector<8x128xi32>
    %227 = arith.select %226, %224, %191 : vector<8x128xi1>, vector<8x128xf32>
    %228 = arith.select %226, %222, %192 : vector<8x128xi1>, vector<8x128xf32>
    %c6_i32 = arith.constant 6 : i32
    %c8_i32_48 = arith.constant 8 : i32
    %229 = arith.muli %c6_i32, %c8_i32_48 : i32
    %230 = tpu.assume_multiple %229, 8 : i32
    %231 = arith.truncf %227 : vector<8x128xf32> to vector<8x128xbf16>
    %cst_49 = arith.constant dense<0.000000e+00> : vector<8x512xf32>
    %232 = tpu.matmul %231, %7, %cst_49 {dimension_numbers = #tpu.dot_dimension_numbers<[1], [0], [0], [1], [0, 0, 1, 1], [], []>} : vector<8x128xbf16>, vector<128x512xbf16>, vector<8x512xf32> -> vector<8x512xf32>
    %233 = arith.index_cast %230 : i32 to index
    %c0_50 = arith.constant 0 : index
    %234 = vector.load %arg10[%233, %c0_50] : memref<64x512xf32, #tpu.memory_space<vmem>>, vector<8x512xf32>
    %235 = arith.addf %232, %234 : vector<8x512xf32>
    %236 = vector.extract_strided_slice %235 {offsets = [0, 0], sizes = [8, 128], strides = [1, 1]} : vector<8x512xf32> to vector<8x128xf32>
    %237 = arith.negf %236 : vector<8x128xf32>
    %238 = math.exp %237 : vector<8x128xf32>
    %cst_51 = arith.constant 1.000000e+00 : f32
    %239 = vector.broadcast %cst_51 : f32 to vector<8x128xf32>
    %240 = arith.addf %239, %238 : vector<8x128xf32>
    %241 = arith.divf %239, %240 : vector<8x128xf32>
    %242 = vector.extract_strided_slice %235 {offsets = [0, 128], sizes = [8, 128], strides = [1, 1]} : vector<8x512xf32> to vector<8x128xf32>
    %243 = arith.negf %242 : vector<8x128xf32>
    %244 = math.exp %243 : vector<8x128xf32>
    %cst_52 = arith.constant 1.000000e+00 : f32
    %245 = vector.broadcast %cst_52 : f32 to vector<8x128xf32>
    %246 = arith.addf %245, %244 : vector<8x128xf32>
    %247 = arith.divf %245, %246 : vector<8x128xf32>
    %248 = vector.extract_strided_slice %235 {offsets = [0, 256], sizes = [8, 128], strides = [1, 1]} : vector<8x512xf32> to vector<8x128xf32>
    %249 = math.tanh %248 : vector<8x128xf32>
    %250 = vector.extract_strided_slice %235 {offsets = [0, 384], sizes = [8, 128], strides = [1, 1]} : vector<8x512xf32> to vector<8x128xf32>
    %251 = arith.negf %250 : vector<8x128xf32>
    %252 = math.exp %251 : vector<8x128xf32>
    %cst_53 = arith.constant 1.000000e+00 : f32
    %253 = vector.broadcast %cst_53 : f32 to vector<8x128xf32>
    %254 = arith.addf %253, %252 : vector<8x128xf32>
    %255 = arith.divf %253, %254 : vector<8x128xf32>
    %256 = arith.mulf %247, %228 : vector<8x128xf32>
    %257 = arith.mulf %241, %249 : vector<8x128xf32>
    %258 = arith.addf %256, %257 : vector<8x128xf32>
    %259 = math.tanh %258 : vector<8x128xf32>
    %260 = arith.mulf %255, %259 : vector<8x128xf32>
    %261 = vector.broadcast %c6_i32 : i32 to vector<8x128xi32>
    %262 = arith.cmpi sgt, %10, %261 : vector<8x128xi32>
    %263 = arith.select %262, %260, %227 : vector<8x128xi1>, vector<8x128xf32>
    %264 = arith.select %262, %258, %228 : vector<8x128xi1>, vector<8x128xf32>
    %c7_i32 = arith.constant 7 : i32
    %c8_i32_54 = arith.constant 8 : i32
    %265 = arith.muli %c7_i32, %c8_i32_54 : i32
    %266 = tpu.assume_multiple %265, 8 : i32
    %267 = arith.truncf %263 : vector<8x128xf32> to vector<8x128xbf16>
    %cst_55 = arith.constant dense<0.000000e+00> : vector<8x512xf32>
    %268 = tpu.matmul %267, %7, %cst_55 {dimension_numbers = #tpu.dot_dimension_numbers<[1], [0], [0], [1], [0, 0, 1, 1], [], []>} : vector<8x128xbf16>, vector<128x512xbf16>, vector<8x512xf32> -> vector<8x512xf32>
    %269 = arith.index_cast %266 : i32 to index
    %c0_56 = arith.constant 0 : index
    %270 = vector.load %arg10[%269, %c0_56] : memref<64x512xf32, #tpu.memory_space<vmem>>, vector<8x512xf32>
    %271 = arith.addf %268, %270 : vector<8x512xf32>
    %272 = vector.extract_strided_slice %271 {offsets = [0, 0], sizes = [8, 128], strides = [1, 1]} : vector<8x512xf32> to vector<8x128xf32>
    %273 = arith.negf %272 : vector<8x128xf32>
    %274 = math.exp %273 : vector<8x128xf32>
    %cst_57 = arith.constant 1.000000e+00 : f32
    %275 = vector.broadcast %cst_57 : f32 to vector<8x128xf32>
    %276 = arith.addf %275, %274 : vector<8x128xf32>
    %277 = arith.divf %275, %276 : vector<8x128xf32>
    %278 = vector.extract_strided_slice %271 {offsets = [0, 128], sizes = [8, 128], strides = [1, 1]} : vector<8x512xf32> to vector<8x128xf32>
    %279 = arith.negf %278 : vector<8x128xf32>
    %280 = math.exp %279 : vector<8x128xf32>
    %cst_58 = arith.constant 1.000000e+00 : f32
    %281 = vector.broadcast %cst_58 : f32 to vector<8x128xf32>
    %282 = arith.addf %281, %280 : vector<8x128xf32>
    %283 = arith.divf %281, %282 : vector<8x128xf32>
    %284 = vector.extract_strided_slice %271 {offsets = [0, 256], sizes = [8, 128], strides = [1, 1]} : vector<8x512xf32> to vector<8x128xf32>
    %285 = math.tanh %284 : vector<8x128xf32>
    %286 = vector.extract_strided_slice %271 {offsets = [0, 384], sizes = [8, 128], strides = [1, 1]} : vector<8x512xf32> to vector<8x128xf32>
    %287 = arith.negf %286 : vector<8x128xf32>
    %288 = math.exp %287 : vector<8x128xf32>
    %cst_59 = arith.constant 1.000000e+00 : f32
    %289 = vector.broadcast %cst_59 : f32 to vector<8x128xf32>
    %290 = arith.addf %289, %288 : vector<8x128xf32>
    %291 = arith.divf %289, %290 : vector<8x128xf32>
    %292 = arith.mulf %283, %264 : vector<8x128xf32>
    %293 = arith.mulf %277, %285 : vector<8x128xf32>
    %294 = arith.addf %292, %293 : vector<8x128xf32>
    %295 = math.tanh %294 : vector<8x128xf32>
    %296 = arith.mulf %291, %295 : vector<8x128xf32>
    %297 = vector.broadcast %c7_i32 : i32 to vector<8x128xi32>
    %298 = arith.cmpi sgt, %10, %297 : vector<8x128xi32>
    %299 = arith.select %298, %296, %263 : vector<8x128xi1>, vector<8x128xf32>
    %300 = arith.select %298, %294, %264 : vector<8x128xi1>, vector<8x128xf32>
    %c8_i32_60 = arith.constant 8 : i32
    %301 = arith.truncf %299 : vector<8x128xf32> to vector<8x128xbf16>
    %c0_61 = arith.constant 0 : index
    %c0_62 = arith.constant 0 : index
    %302 = vector.load %arg5[%c0_61, %c0_62] : memref<128x128xbf16, #tpu.memory_space<vmem>>, vector<128x128xbf16>
    %cst_63 = arith.constant dense<0.000000e+00> : vector<8x128xf32>
    %303 = tpu.matmul %301, %302, %cst_63 {dimension_numbers = #tpu.dot_dimension_numbers<[1], [0], [0], [1], [0, 0, 1, 1], [], []>} : vector<8x128xbf16>, vector<128x128xbf16>, vector<8x128xf32> -> vector<8x128xf32>
    %c0_64 = arith.constant 0 : index
    %c0_65 = arith.constant 0 : index
    %304 = vector.load %arg6[%c0_64, %c0_65] : memref<1x128xf32, #tpu.memory_space<vmem>>, vector<1x128xf32>
    %305 = vector.broadcast %304 : vector<1x128xf32> to vector<8x128xf32>
    %306 = arith.addf %303, %305 : vector<8x128xf32>
    %cst_66 = arith.constant 0.000000e+00 : f32
    %307 = vector.broadcast %cst_66 : f32 to vector<8x128xf32>
    %308 = arith.maximumf %306, %307 : vector<8x128xf32>
    %309 = arith.truncf %308 : vector<8x128xf32> to vector<8x128xbf16>
    %c0_67 = arith.constant 0 : index
    %c0_68 = arith.constant 0 : index
    %310 = vector.load %arg7[%c0_67, %c0_68] : memref<128x128xbf16, #tpu.memory_space<vmem>>, vector<128x128xbf16>
    %cst_69 = arith.constant dense<0.000000e+00> : vector<8x128xf32>
    %311 = tpu.matmul %309, %310, %cst_69 {dimension_numbers = #tpu.dot_dimension_numbers<[1], [0], [0], [1], [0, 0, 1, 1], [], []>} : vector<8x128xbf16>, vector<128x128xbf16>, vector<8x128xf32> -> vector<8x128xf32>
    %c0_70 = arith.constant 0 : index
    %c0_71 = arith.constant 0 : index
    %312 = vector.load %arg8[%c0_70, %c0_71] : memref<1x128xf32, #tpu.memory_space<vmem>>, vector<1x128xf32>
    %313 = vector.broadcast %312 : vector<1x128xf32> to vector<8x128xf32>
    %314 = arith.addf %311, %313 : vector<8x128xf32>
    %c0_72 = arith.constant 0 : index
    %c0_73 = arith.constant 0 : index
    %315 = vector.load %arg9[%c0_72, %c0_73] : memref<8x128xf32, #tpu.memory_space<vmem>>, vector<8x128xf32>
    tpu.vector_store %arg9[%c0_72, %c0_73], %314 {strides = array<i32>} : memref<8x128xf32, #tpu.memory_space<vmem>>, vector<8x128xf32>,
    return
  }
}

</mosaic_0001>

<llo_original>
// kernel: tpu_custom_call.1
$region0: #{tpu_custom_call.1}
  #allocation0 [shape = 'u32[]', space=smem, size = 0x4, offset = 0x4, fixed_abs, tag = 'smem constant byte address 0x4 - core index']
  #allocation1 [shape = 'u32[144,128]{1,0:T(1,128)}', space=vmem, size = 0x12000, scoped, tag = 'internal scratch']
  #allocation2 [shape = 'f32[64,512]{1,0:T(8,128)}', space=vmem, size = 0x20000, scoped, tag = 'scratch operand']
  %s0 = inlined_call_operand.vmem [shape: s32[8,1], index: 0, kind: input, shape index: {}]
  %s1 = inlined_call_operand.hbm [shape: bf16[64,128], index: 1, kind: input, shape index: {}]
  %s2 = inlined_call_operand.hbm [shape: bf16[128,512], index: 2, kind: input, shape index: {}]
  %s3 = inlined_call_operand.hbm [shape: bf16[128,512], index: 3, kind: input, shape index: {}]
  %s4 = inlined_call_operand.vmem [shape: f32[1,512], index: 4, kind: input, shape index: {}]
  %s5 = inlined_call_operand.hbm [shape: bf16[128,128], index: 5, kind: input, shape index: {}]
  %s6 = inlined_call_operand.vmem [shape: f32[1,128], index: 6, kind: input, shape index: {}]
  %s7 = inlined_call_operand.hbm [shape: bf16[128,128], index: 7, kind: input, shape index: {}]
  %s8 = inlined_call_operand.vmem [shape: f32[1,128], index: 8, kind: input, shape index: {}]
  %s9 = inlined_call_operand.hbm [shape: f32[8,128], index: 9, kind: output, shape index: {}]
  %s10 = sld [smem:[#allocation0]]
  $region66: #{tpu_custom_call.1} parent=0
    _
  %s12 = ssub.s32 1, %s10
  %s13 = scalar_select 0, %s12, %s10
  $region1: #{tpu_custom_call.1} parent=0
    #allocation3 [shape = 'u8[16384]{0}', space=vmem, size = 0x4000, scoped, tag = 'input window, operand 1, single buffered']
    #allocation4 [shape = 's32[1]{0}', space=sflag, size = 0x4, scoped, tag = 'scoped memory for tpu_custom_call.1']
    #allocation5 [shape = 's32[1]{0}', space=sflag, size = 0x4, scoped, tag = 'scoped memory for tpu_custom_call.1']
    #allocation6 [shape = 'u8[131072]{0}', space=vmem, size = 0x20000, scoped, tag = 'input window, operand 2, single buffered']
    #allocation7 [shape = 's32[1]{0}', space=sflag, size = 0x4, scoped, tag = 'scoped memory for tpu_custom_call.1']
    #allocation8 [shape = 'u8[131072]{0}', space=vmem, size = 0x20000, scoped, tag = 'input window, operand 3, single buffered']
    #allocation9 [shape = 'u8[32768]{0}', space=vmem, size = 0x8000, scoped, tag = 'input window, operand 5, single buffered']
    #allocation10 [shape = 's32[1]{0}', space=sflag, size = 0x4, scoped, tag = 'scoped memory for tpu_custom_call.1']
    #allocation11 [shape = 'u8[32768]{0}', space=vmem, size = 0x8000, scoped, tag = 'input window, operand 7, single buffered']
    #allocation12 [shape = 'u8[4096]{0}', space=vmem, size = 0x1000, scoped, tag = 'output window, operand 0, single buffered']
    %14 = vsyncpa [#allocation4], 0
    %15 = vsyncpa [#allocation7], 0
    %16 = vsyncpa [#allocation10], 0
    %17 = vsyncpa [#allocation5], 0
    // Predicated region
    $region2: #{tpu_custom_call.1} parent=1 // pred_check
      _
    $region3: #{tpu_custom_call.1} parent=1 // pred_check_branch
      %19 = sbr.rel (0) target = $region5
    $region4: #{tpu_custom_call.1} parent=1 // pred_region
      _
    $region5: #{tpu_custom_call.1} parent=1 // pred_fallthru
      _
    // Predicated region
    $region6: #{tpu_custom_call.1} parent=1 // pred_check
      _
    $region7: #{tpu_custom_call.1} parent=1 // pred_check_branch
      %21 = sbr.rel (0) target = $region9
    $region8: #{tpu_custom_call.1} parent=1 // pred_region
      %s23 = ssub.s32 512, 512
      %24 = vsyncadd [#allocation4], %s23
      %s25 = sshll.u32 [#allocation3], 4
      %s26 = int_to_ptr.vmem [resolvable:$true] %s25
      %31 = dma.hbm_to_vmem [thread:$0]  %s1, 512, %s26, [#allocation4], 64, 64, 4
    $region9: #{tpu_custom_call.1} parent=1 // pred_fallthru
      _
    // Predicated region
    $region10: #{tpu_custom_call.1} parent=1 // pred_check
      _
    $region11: #{tpu_custom_call.1} parent=1 // pred_check_branch
      %33 = sbr.rel (0) target = $region13
    $region12: #{tpu_custom_call.1} parent=1 // pred_region
      %s35 = ssub.s32 4096, 4096
      %36 = vsyncadd [#allocation7], %s35
      %s37 = sshll.u32 [#allocation6], 4
      %s38 = int_to_ptr.vmem [resolvable:$true] %s37
      %43 = dma.hbm_to_vmem [thread:$0]  %s2, 4096, %s38, [#allocation7], 256, 256, 16
    $region13: #{tpu_custom_call.1} parent=1 // pred_fallthru
      _
    // Predicated region
    $region14: #{tpu_custom_call.1} parent=1 // pred_check
      _
    $region15: #{tpu_custom_call.1} parent=1 // pred_check_branch
      %45 = sbr.rel (0) target = $region17
    $region16: #{tpu_custom_call.1} parent=1 // pred_region
      %s47 = ssub.s32 4096, 4096
      %48 = vsyncadd [#allocation7], %s47
      %s49 = sshll.u32 [#allocation8], 4
      %s50 = int_to_ptr.vmem [resolvable:$true] %s49
      %55 = dma.hbm_to_vmem [thread:$0]  %s3, 4096, %s50, [#allocation7], 256, 256, 16
    $region17: #{tpu_custom_call.1} parent=1 // pred_fallthru
      _
    // Predicated region
    $region18: #{tpu_custom_call.1} parent=1 // pred_check
      _
    $region19: #{tpu_custom_call.1} parent=1 // pred_check_branch
      %57 = sbr.rel (0) target = $region21
    $region20: #{tpu_custom_call.1} parent=1 // pred_region
      _
    $region21: #{tpu_custom_call.1} parent=1 // pred_fallthru
      _
    // Predicated region
    $region22: #{tpu_custom_call.1} parent=1 // pred_check
      _
    $region23: #{tpu_custom_call.1} parent=1 // pred_check_branch
      %59 = sbr.rel (0) target = $region25
    $region24: #{tpu_custom_call.1} parent=1 // pred_region
      %s61 = ssub.s32 1024, 1024
      %62 = vsyncadd [#allocation10], %s61
      %s63 = sshll.u32 [#allocation9], 4
      %s64 = int_to_ptr.vmem [resolvable:$true] %s63
      %69 = dma.hbm_to_vmem [thread:$0]  %s5, 1024, %s64, [#allocation10], 64, 64, 4
    $region25: #{tpu_custom_call.1} parent=1 // pred_fallthru
      _
    // Predicated region
    $region26: #{tpu_custom_call.1} parent=1 // pred_check
      _
    $region27: #{tpu_custom_call.1} parent=1 // pred_check_branch
      %71 = sbr.rel (0) target = $region29
    $region28: #{tpu_custom_call.1} parent=1 // pred_region
      _
    $region29: #{tpu_custom_call.1} parent=1 // pred_fallthru
      _
    // Predicated region
    $region30: #{tpu_custom_call.1} parent=1 // pred_check
      _
    $region31: #{tpu_custom_call.1} parent=1 // pred_check_branch
      %73 = sbr.rel (0) target = $region33
    $region32: #{tpu_custom_call.1} parent=1 // pred_region
      %s75 = ssub.s32 1024, 1024
      %76 = vsyncadd [#allocation10], %s75
      %s77 = sshll.u32 [#allocation11], 4
      %s78 = int_to_ptr.vmem [resolvable:$true] %s77
      %83 = dma.hbm_to_vmem [thread:$0]  %s7, 1024, %s78, [#allocation10], 64, 64, 4
    $region33: #{tpu_custom_call.1} parent=1 // pred_fallthru
      _
    // Predicated region
    $region34: #{tpu_custom_call.1} parent=1 // pred_check
      _
    $region35: #{tpu_custom_call.1} parent=1 // pred_check_branch
      %85 = sbr.rel (0) target = $region37
    $region36: #{tpu_custom_call.1} parent=1 // pred_region
      _
    $region37: #{tpu_custom_call.1} parent=1 // pred_fallthru
      _
    // Predicated region
    $region38: #{tpu_custom_call.1} parent=1 // pred_check
      _
    $region39: #{tpu_custom_call.1} parent=1 // pred_check_branch
      %87 = sbr.rel (0) target = $region41
    $region40: #{tpu_custom_call.1} parent=1 // pred_region
      %88 = dma.done [#allocation4], 512
    $region41: #{tpu_custom_call.1} parent=1 // pred_fallthru
      _
    // Predicated region
    $region42: #{tpu_custom_call.1} parent=1 // pred_check
      _
    $region43: #{tpu_custom_call.1} parent=1 // pred_check_branch
      %90 = sbr.rel (0) target = $region45
    $region44: #{tpu_custom_call.1} parent=1 // pred_region
      %91 = dma.done [#allocation7], 4096
    $region45: #{tpu_custom_call.1} parent=1 // pred_fallthru
      _
    // Predicated region
    $region46: #{tpu_custom_call.1} parent=1 // pred_check
      _
    $region47: #{tpu_custom_call.1} parent=1 // pred_check_branch
      %93 = sbr.rel (0) target = $region49
    $region48: #{tpu_custom_call.1} parent=1 // pred_region
      %94 = dma.done [#allocation7], 4096
    $region49: #{tpu_custom_call.1} parent=1 // pred_fallthru
      _
    // Predicated region
    $region50: #{tpu_custom_call.1} parent=1 // pred_check
      _
    $region51: #{tpu_custom_call.1} parent=1 // pred_check_branch
      %96 = sbr.rel (0) target = $region53
    $region52: #{tpu_custom_call.1} parent=1 // pred_region
      %97 = dma.done [#allocation10], 1024
    $region53: #{tpu_custom_call.1} parent=1 // pred_fallthru
      _
    // Predicated region
    $region54: #{tpu_custom_call.1} parent=1 // pred_check
      _
    $region55: #{tpu_custom_call.1} parent=1 // pred_check_branch
      %99 = sbr.rel (0) target = $region57
    $region56: #{tpu_custom_call.1} parent=1 // pred_region
      %100 = dma.done [#allocation10], 1024
    $region57: #{tpu_custom_call.1} parent=1 // pred_fallthru
      _
    %v102 = vld [vmem:[#allocation3] sm:$0xf]
    %v103 = vld [vmem:[#allocation3 + $0x4] sm:$0xf]
    %v104 = vld [vmem:[#allocation3 + $0x8] sm:$0xf]
    %v105 = vld [vmem:[#allocation3 + $0xc] sm:$0xf]
    %v106 = vld [vmem:[#allocation3 + $0x10] sm:$0xf]
    %v107 = vld [vmem:[#allocation3 + $0x14] sm:$0xf]
    %v108 = vld [vmem:[#allocation3 + $0x18] sm:$0xf]
    %v109 = vld [vmem:[#allocation3 + $0x1c] sm:$0xf]
    %v110 = vld [vmem:[#allocation6] sm:$0xff]
    %v111 = vld [vmem:[#allocation6 + $0x8] sm:$0xff]
    %v112 = vld [vmem:[#allocation6 + $0x10] sm:$0xff]
    %v113 = vld [vmem:[#allocation6 + $0x18] sm:$0xff]
    %v114 = vld [vmem:[#allocation6 + $0x20] sm:$0xff]
    %v115 = vld [vmem:[#allocation6 + $0x28] sm:$0xff]
    %v116 = vld [vmem:[#allocation6 + $0x30] sm:$0xff]
    %v117 = vld [vmem:[#allocation6 + $0x38] sm:$0xff]
    %v118 = vld [vmem:[#allocation6 + $0x40] sm:$0xff]
    %v119 = vld [vmem:[#allocation6 + $0x48] sm:$0xff]
    %v120 = vld [vmem:[#allocation6 + $0x50] sm:$0xff]
    %v121 = vld [vmem:[#allocation6 + $0x58] sm:$0xff]
    %v122 = vld [vmem:[#allocation6 + $0x60] sm:$0xff]
    %v123 = vld [vmem:[#allocation6 + $0x68] sm:$0xff]
    %v124 = vld [vmem:[#allocation6 + $0x70] sm:$0xff]
    %v125 = vld [vmem:[#allocation6 + $0x78] sm:$0xff]
    %v126 = vld [vmem:[#allocation6 + $0x80] sm:$0xff]
    %v127 = vld [vmem:[#allocation6 + $0x88] sm:$0xff]
    %v128 = vld [vmem:[#allocation6 + $0x90] sm:$0xff]
    %v129 = vld [vmem:[#allocation6 + $0x98] sm:$0xff]
    %v130 = vld [vmem:[#allocation6 + $0xa0] sm:$0xff]
    %v131 = vld [vmem:[#allocation6 + $0xa8] sm:$0xff]
    %v132 = vld [vmem:[#allocation6 + $0xb0] sm:$0xff]
    %v133 = vld [vmem:[#allocation6 + $0xb8] sm:$0xff]
    %v134 = vld [vmem:[#allocation6 + $0xc0] sm:$0xff]
    %v135 = vld [vmem:[#allocation6 + $0xc8] sm:$0xff]
    %v136 = vld [vmem:[#allocation6 + $0xd0] sm:$0xff]
    %v137 = vld [vmem:[#allocation6 + $0xd8] sm:$0xff]
    %v138 = vld [vmem:[#allocation6 + $0xe0] sm:$0xff]
    %v139 = vld [vmem:[#allocation6 + $0xe8] sm:$0xff]
    %v140 = vld [vmem:[#allocation6 + $0xf0] sm:$0xff]
    %v141 = vld [vmem:[#allocation6 + $0xf8] sm:$0xff]
    %v142 = vld [vmem:[%s4] sm:$0xf]
    %v144 = vlaneseq
    %v145 = vshrl.u32 %v144, 7
    %v146 = vsub.s32 0, %v145
    %v147 = vrot.slane %v142, %v146
    %v148 = vlaneseq
    %v149 = vshrl.u32 %v148, 7
    %v150 = vsub.s32 1, %v149
    %v151 = vrot.slane %v142, %v150
    %v152 = vlaneseq
    %v153 = vshrl.u32 %v152, 7
    %v154 = vsub.s32 2, %v153
    %v155 = vrot.slane %v142, %v154
    %v156 = vlaneseq
    %v157 = vshrl.u32 %v156, 7
    %v158 = vsub.s32 3, %v157
    %v159 = vrot.slane %v142, %v158
    %v172 = vunpack.c.l.b16 %v102
    %v173 = vunpack.c.l.b16 %v103
    %v174 = vunpack.c.l.b16 %v104
    %v175 = vunpack.c.l.b16 %v105
    %v176 = vunpack.c.l.b16 %v106
    %v177 = vunpack.c.l.b16 %v107
    %v178 = vunpack.c.l.b16 %v108
    %v179 = vunpack.c.l.b16 %v109
    %v180 = vpack.c.b16 %v173, %v172
    %v181 = vpack.c.b16 %v175, %v174
    %v182 = vpack.c.b16 %v177, %v176
    %v183 = vpack.c.b16 %v179, %v178
    %v220 = vunpack.c.l.b16 %v110
    %v221 = vunpack.c.h.b16 %v110
    %v222 = vunpack.c.l.b16 %v111
    %v223 = vunpack.c.h.b16 %v111
    %v224 = vunpack.c.l.b16 %v112
    %v225 = vunpack.c.h.b16 %v112
    %v226 = vunpack.c.l.b16 %v113
    %v227 = vunpack.c.h.b16 %v113
    %v228 = vunpack.c.l.b16 %v114
    %v229 = vunpack.c.h.b16 %v114
    %v230 = vunpack.c.l.b16 %v115
    %v231 = vunpack.c.h.b16 %v115
    %v232 = vunpack.c.l.b16 %v116
    %v233 = vunpack.c.h.b16 %v116
    %v234 = vunpack.c.l.b16 %v117
    %v235 = vunpack.c.h.b16 %v117
    %v236 = vunpack.c.l.b16 %v118
    %v237 = vunpack.c.h.b16 %v118
    %v238 = vunpack.c.l.b16 %v119
    %v239 = vunpack.c.h.b16 %v119
    %v240 = vunpack.c.l.b16 %v120
    %v241 = vunpack.c.h.b16 %v120
    %v242 = vunpack.c.l.b16 %v121
    %v243 = vunpack.c.h.b16 %v121
    %v244 = vunpack.c.l.b16 %v122
    %v245 = vunpack.c.h.b16 %v122
    %v246 = vunpack.c.l.b16 %v123
    %v247 = vunpack.c.h.b16 %v123
    %v248 = vunpack.c.l.b16 %v124
    %v249 = vunpack.c.h.b16 %v124
    %v250 = vunpack.c.l.b16 %v125
    %v251 = vunpack.c.h.b16 %v125
    %v252 = vunpack.c.l.b16 %v126
    %v253 = vunpack.c.h.b16 %v126
    %v254 = vunpack.c.l.b16 %v127
    %v255 = vunpack.c.h.b16 %v127
    %v256 = vunpack.c.l.b16 %v128
    %v257 = vunpack.c.h.b16 %v128
    %v258 = vunpack.c.l.b16 %v129
    %v259 = vunpack.c.h.b16 %v129
    %v260 = vunpack.c.l.b16 %v130
    %v261 = vunpack.c.h.b16 %v130
    %v262 = vunpack.c.l.b16 %v131
    %v263 = vunpack.c.h.b16 %v131
    %v264 = vunpack.c.l.b16 %v132
    %v265 = vunpack.c.h.b16 %v132
    %v266 = vunpack.c.l.b16 %v133
    %v267 = vunpack.c.h.b16 %v133
    %v268 = vunpack.c.l.b16 %v134
    %v269 = vunpack.c.h.b16 %v134
    %v270 = vunpack.c.l.b16 %v135
    %v271 = vunpack.c.h.b16 %v135
    %v272 = vunpack.c.l.b16 %v136
    %v273 = vunpack.c.h.b16 %v136
    %v274 = vunpack.c.l.b16 %v137
    %v275 = vunpack.c.h.b16 %v137
    %v276 = vunpack.c.l.b16 %v138
    %v277 = vunpack.c.h.b16 %v138
    %v278 = vunpack.c.l.b16 %v139
    %v279 = vunpack.c.h.b16 %v139
    %v280 = vunpack.c.l.b16 %v140
    %v281 = vunpack.c.h.b16 %v140
    %v282 = vunpack.c.l.b16 %v141
    %v283 = vunpack.c.h.b16 %v141
    %v284 = vpack.c.b16 %v224, %v220
    %v285 = vpack.c.b16 %v225, %v221
    %v286 = vpack.c.b16 %v226, %v222
    %v287 = vpack.c.b16 %v227, %v223
    %v288 = vpack.c.b16 %v232, %v228
    %v289 = vpack.c.b16 %v233, %v229
    %v290 = vpack.c.b16 %v234, %v230
    %v291 = vpack.c.b16 %v235, %v231
    %v292 = vpack.c.b16 %v240, %v236
    %v293 = vpack.c.b16 %v241, %v237
    %v294 = vpack.c.b16 %v242, %v238
    %v295 = vpack.c.b16 %v243, %v239
    %v296 = vpack.c.b16 %v248, %v244
    %v297 = vpack.c.b16 %v249, %v245
    %v298 = vpack.c.b16 %v250, %v246
    %v299 = vpack.c.b16 %v251, %v247
    %v300 = vpack.c.b16 %v256, %v252
    %v301 = vpack.c.b16 %v257, %v253
    %v302 = vpack.c.b16 %v258, %v254
    %v303 = vpack.c.b16 %v259, %v255
    %v304 = vpack.c.b16 %v264, %v260
    %v305 = vpack.c.b16 %v265, %v261
    %v306 = vpack.c.b16 %v266, %v262
    %v307 = vpack.c.b16 %v267, %v263
    %v308 = vpack.c.b16 %v272, %v268
    %v309 = vpack.c.b16 %v273, %v269
    %v310 = vpack.c.b16 %v274, %v270
    %v311 = vpack.c.b16 %v275, %v271
    %v312 = vpack.c.b16 %v280, %v276
    %v313 = vpack.c.b16 %v281, %v277
    %v314 = vpack.c.b16 %v282, %v278
    %v315 = vpack.c.b16 %v283, %v279
    %348 = vmatprep.subr.bf16.mxu0 %v285
    %349 = vmatpush1.bf16.msra.mxu0 %v284
    %350 = vmatprep.subr.bf16.mxu0 %v289
    %351 = vmatpush1.bf16.msra.mxu0 %v288
    %352 = vmatprep.subr.bf16.mxu0 %v293
    %353 = vmatpush1.bf16.msra.mxu0 %v292
    %354 = vmatprep.subr.bf16.mxu0 %v297
    %355 = vmatpush1.bf16.msra.mxu0 %v296
    %356 = vmatprep.subr.bf16.mxu0 %v301
    %357 = vmatpush1.bf16.msra.mxu0 %v300
    %358 = vmatprep.subr.bf16.mxu0 %v305
    %359 = vmatpush1.bf16.msra.mxu0 %v304
    %360 = vmatprep.subr.bf16.mxu0 %v309
    %361 = vmatpush1.bf16.msra.mxu0 %v308
    %362 = vmatprep.subr.bf16.mxu0 %v313
    %363 = vmatpush1.bf16.msra.mxu0 %v312
    %364 = vmatprep.subr.bf16.mxu0 0
    %365 = vmatpush1.bf16.msra.mxu0 0
    %366 = vmatprep.subr.bf16.mxu0 0
    %367 = vmatpush1.bf16.msra.mxu0 0
    %368 = vmatprep.subr.bf16.mxu0 0
    %369 = vmatpush1.bf16.msra.mxu0 0
    %370 = vmatprep.subr.bf16.mxu0 0
    %371 = vmatpush1.bf16.msra.mxu0 0
    %372 = vmatprep.subr.bf16.mxu0 0
    %373 = vmatpush1.bf16.msra.mxu0 0
    %374 = vmatprep.subr.bf16.mxu0 0
    %375 = vmatpush1.bf16.msra.mxu0 0
    %376 = vmatprep.subr.bf16.mxu0 0
    %377 = vmatpush1.bf16.msra.mxu0 0
    %378 = vmatprep.subr.bf16.mxu0 0
    %379 = vmatpush1.bf16.msra.mxu0 0
    %380 = vmatprep.mubr.bf16.mxu0 0
    %381 = vmatmul.mubr.bf16.gmra.mrb[0].mxu0 %v180
    %v382 = vpop.f32.mrb[0].mxu0
    %v383 = vadd.f32 %v147, %v382
    %v384 = vpop.f32.mrb[0].mxu0
    %v385 = vadd.f32 %v151, %v384
    %v386 = vpop.f32.mrb[0].mxu0
    %v387 = vadd.f32 %v147, %v386
    %v388 = vpop.f32.mrb[0].mxu0
    %v389 = vadd.f32 %v151, %v388
    %390 = vmatprep.mubr.bf16.mxu0 0
    %391 = vmatmul.mubr.bf16.gmra.mrb[0].mxu0 %v181
    %v392 = vpop.f32.mrb[0].mxu0
    %v393 = vadd.f32 %v147, %v392
    %v394 = vpop.f32.mrb[0].mxu0
    %v395 = vadd.f32 %v151, %v394
    %v396 = vpop.f32.mrb[0].mxu0
    %v397 = vadd.f32 %v147, %v396
    %v398 = vpop.f32.mrb[0].mxu0
    %v399 = vadd.f32 %v151, %v398
    %400 = vmatprep.mubr.bf16.mxu0 0
    %401 = vmatmul.mubr.bf16.gmra.mrb[0].mxu0 %v182
    %v402 = vpop.f32.mrb[0].mxu0
    %v403 = vadd.f32 %v147, %v402
    %v404 = vpop.f32.mrb[0].mxu0
    %v405 = vadd.f32 %v151, %v404
    %v406 = vpop.f32.mrb[0].mxu0
    %v407 = vadd.f32 %v147, %v406
    %v408 = vpop.f32.mrb[0].mxu0
    %v409 = vadd.f32 %v151, %v408
    %410 = vmatprep.mubr.bf16.mxu0 0
    %411 = vmatmul.mubr.bf16.gmra.mrb[0].mxu0 %v183
    %v412 = vpop.f32.mrb[0].mxu0
    %v413 = vadd.f32 %v147, %v412
    %v414 = vpop.f32.mrb[0].mxu0
    %v415 = vadd.f32 %v151, %v414
    %v416 = vpop.f32.mrb[0].mxu0
    %v417 = vadd.f32 %v147, %v416
    %v418 = vpop.f32.mrb[0].mxu0
    %v419 = vadd.f32 %v151, %v418
    %420 = vdwg.mxu0
    %421 = vmatprep.subr.bf16.mxu0 %v287
    %422 = vmatpush1.bf16.msra.mxu0 %v286
    %423 = vmatprep.subr.bf16.mxu0 %v291
    %424 = vmatpush1.bf16.msra.mxu0 %v290
    %425 = vmatprep.subr.bf16.mxu0 %v295
    %426 = vmatpush1.bf16.msra.mxu0 %v294
    %427 = vmatprep.subr.bf16.mxu0 %v299
    %428 = vmatpush1.bf16.msra.mxu0 %v298
    %429 = vmatprep.subr.bf16.mxu0 %v303
    %430 = vmatpush1.bf16.msra.mxu0 %v302
    %431 = vmatprep.subr.bf16.mxu0 %v307
    %432 = vmatpush1.bf16.msra.mxu0 %v306
    %433 = vmatprep.subr.bf16.mxu0 %v311
    %434 = vmatpush1.bf16.msra.mxu0 %v310
    %435 = vmatprep.subr.bf16.mxu0 %v315
    %436 = vmatpush1.bf16.msra.mxu0 %v314
    %437 = vmatprep.subr.bf16.mxu0 0
    %438 = vmatpush1.bf16.msra.mxu0 0
    %439 = vmatprep.subr.bf16.mxu0 0
    %440 = vmatpush1.bf16.msra.mxu0 0
    %441 = vmatprep.subr.bf16.mxu0 0
    %442 = vmatpush1.bf16.msra.mxu0 0
    %443 = vmatprep.subr.bf16.mxu0 0
    %444 = vmatpush1.bf16.msra.mxu0 0
    %445 = vmatprep.subr.bf16.mxu0 0
    %446 = vmatpush1.bf16.msra.mxu0 0
    %447 = vmatprep.subr.bf16.mxu0 0
    %448 = vmatpush1.bf16.msra.mxu0 0
    %449 = vmatprep.subr.bf16.mxu0 0
    %450 = vmatpush1.bf16.msra.mxu0 0
    %451 = vmatprep.subr.bf16.mxu0 0
    %452 = vmatpush1.bf16.msra.mxu0 0
    %453 = vmatprep.mubr.bf16.mxu0 0
    %454 = vmatmul.mubr.bf16.gmra.mrb[0].mxu0 %v180
    %v455 = vpop.f32.mrb[0].mxu0
    %v456 = vadd.f32 %v155, %v455
    %v457 = vpop.f32.mrb[0].mxu0
    %v458 = vadd.f32 %v159, %v457
    %v459 = vpop.f32.mrb[0].mxu0
    %v460 = vadd.f32 %v155, %v459
    %v461 = vpop.f32.mrb[0].mxu0
    %v462 = vadd.f32 %v159, %v461
    %463 = vmatprep.mubr.bf16.mxu0 0
    %464 = vmatmul.mubr.bf16.gmra.mrb[0].mxu0 %v181
    %v465 = vpop.f32.mrb[0].mxu0
    %v466 = vadd.f32 %v155, %v465
    %v467 = vpop.f32.mrb[0].mxu0
    %v468 = vadd.f32 %v159, %v467
    %v469 = vpop.f32.mrb[0].mxu0
    %v470 = vadd.f32 %v155, %v469
    %v471 = vpop.f32.mrb[0].mxu0
    %v472 = vadd.f32 %v159, %v471
    %473 = vmatprep.mubr.bf16.mxu0 0
    %474 = vmatmul.mubr.bf16.gmra.mrb[0].mxu0 %v182
    %v475 = vpop.f32.mrb[0].mxu0
    %v476 = vadd.f32 %v155, %v475
    %v477 = vpop.f32.mrb[0].mxu0
    %v478 = vadd.f32 %v159, %v477
    %v479 = vpop.f32.mrb[0].mxu0
    %v480 = vadd.f32 %v155, %v479
    %v481 = vpop.f32.mrb[0].mxu0
    %v482 = vadd.f32 %v159, %v481
    %483 = vmatprep.mubr.bf16.mxu0 0
    %484 = vmatmul.mubr.bf16.gmra.mrb[0].mxu0 %v183
    %v485 = vpop.f32.mrb[0].mxu0
    %v486 = vadd.f32 %v155, %v485
    %v487 = vpop.f32.mrb[0].mxu0
    %v488 = vadd.f32 %v159, %v487
    %v489 = vpop.f32.mrb[0].mxu0
    %v490 = vadd.f32 %v155, %v489
    %v491 = vpop.f32.mrb[0].mxu0
    %v492 = vadd.f32 %v159, %v491
    %493 = vdwg.mxu0
    %494 = vst [vmem:[#allocation2] sm:$0xff] %v383
    %495 = vst [vmem:[#allocation2 + $0x8] sm:$0xff] %v385
    %496 = vst [vmem:[#allocation2 + $0x10] sm:$0xff] %v456
    %497 = vst [vmem:[#allocation2 + $0x18] sm:$0xff] %v458
    %498 = vst [vmem:[#allocation2 + $0x20] sm:$0xff] %v387
    %499 = vst [vmem:[#allocation2 + $0x28] sm:$0xff] %v389
    %500 = vst [vmem:[#allocation2 + $0x30] sm:$0xff] %v460
    %501 = vst [vmem:[#allocation2 + $0x38] sm:$0xff] %v462
    %502 = vst [vmem:[#allocation2 + $0x40] sm:$0xff] %v393
    %503 = vst [vmem:[#allocation2 + $0x48] sm:$0xff] %v395
    %504 = vst [vmem:[#allocation2 + $0x50] sm:$0xff] %v466
    %505 = vst [vmem:[#allocation2 + $0x58] sm:$0xff] %v468
    %506 = vst [vmem:[#allocation2 + $0x60] sm:$0xff] %v397
    %507 = vst [vmem:[#allocation2 + $0x68] sm:$0xff] %v399
    %508 = vst [vmem:[#allocation2 + $0x70] sm:$0xff] %v470
    %509 = vst [vmem:[#allocation2 + $0x78] sm:$0xff] %v472
    %510 = vst [vmem:[#allocation2 + $0x80] sm:$0xff] %v403
    %511 = vst [vmem:[#allocation2 + $0x88] sm:$0xff] %v405
    %512 = vst [vmem:[#allocation2 + $0x90] sm:$0xff] %v476
    %513 = vst [vmem:[#allocation2 + $0x98] sm:$0xff] %v478
    %514 = vst [vmem:[#allocation2 + $0xa0] sm:$0xff] %v407
    %515 = vst [vmem:[#allocation2 + $0xa8] sm:$0xff] %v409
    %516 = vst [vmem:[#allocation2 + $0xb0] sm:$0xff] %v480
    %517 = vst [vmem:[#allocation2 + $0xb8] sm:$0xff] %v482
    %518 = vst [vmem:[#allocation2 + $0xc0] sm:$0xff] %v413
    %519 = vst [vmem:[#allocation2 + $0xc8] sm:$0xff] %v415
    %520 = vst [vmem:[#allocation2 + $0xd0] sm:$0xff] %v486
    %521 = vst [vmem:[#allocation2 + $0xd8] sm:$0xff] %v488
    %522 = vst [vmem:[#allocation2 + $0xe0] sm:$0xff] %v417
    %523 = vst [vmem:[#allocation2 + $0xe8] sm:$0xff] %v419
    %524 = vst [vmem:[#allocation2 + $0xf0] sm:$0xff] %v490
    %525 = vst [vmem:[#allocation2 + $0xf8] sm:$0xff] %v492
    %v526 = vld [vmem:[#allocation8] sm:$0xff]
    %v527 = vld [vmem:[#allocation8 + $0x8] sm:$0xff]
    %v528 = vld [vmem:[#allocation8 + $0x10] sm:$0xff]
    %v529 = vld [vmem:[#allocation8 + $0x18] sm:$0xff]
    %v530 = vld [vmem:[#allocation8 + $0x20] sm:$0xff]
    %v531 = vld [vmem:[#allocation8 + $0x28] sm:$0xff]
    %v532 = vld [vmem:[#allocation8 + $0x30] sm:$0xff]
    %v533 = vld [vmem:[#allocation8 + $0x38] sm:$0xff]
    %v534 = vld [vmem:[#allocation8 + $0x40] sm:$0xff]
    %v535 = vld [vmem:[#allocation8 + $0x48] sm:$0xff]
    %v536 = vld [vmem:[#allocation8 + $0x50] sm:$0xff]
    %v537 = vld [vmem:[#allocation8 + $0x58] sm:$0xff]
    %v538 = vld [vmem:[#allocation8 + $0x60] sm:$0xff]
    %v539 = vld [vmem:[#allocation8 + $0x68] sm:$0xff]
    %v540 = vld [vmem:[#allocation8 + $0x70] sm:$0xff]
    %v541 = vld [vmem:[#allocation8 + $0x78] sm:$0xff]
    %v542 = vld [vmem:[#allocation8 + $0x80] sm:$0xff]
    %v543 = vld [vmem:[#allocation8 + $0x88] sm:$0xff]
    %v544 = vld [vmem:[#allocation8 + $0x90] sm:$0xff]
    %v545 = vld [vmem:[#allocation8 + $0x98] sm:$0xff]
    %v546 = vld [vmem:[#allocation8 + $0xa0] sm:$0xff]
    %v547 = vld [vmem:[#allocation8 + $0xa8] sm:$0xff]
    %v548 = vld [vmem:[#allocation8 + $0xb0] sm:$0xff]
    %v549 = vld [vmem:[#allocation8 + $0xb8] sm:$0xff]
    %v550 = vld [vmem:[#allocation8 + $0xc0] sm:$0xff]
    %v551 = vld [vmem:[#allocation8 + $0xc8] sm:$0xff]
    %v552 = vld [vmem:[#allocation8 + $0xd0] sm:$0xff]
    %v553 = vld [vmem:[#allocation8 + $0xd8] sm:$0xff]
    %v554 = vld [vmem:[#allocation8 + $0xe0] sm:$0xff]
    %v555 = vld [vmem:[#allocation8 + $0xe8] sm:$0xff]
    %v556 = vld [vmem:[#allocation8 + $0xf0] sm:$0xff]
    %v557 = vld [vmem:[#allocation8 + $0xf8] sm:$0xff]
    %v558 = vld [vmem:[%s0] sm:$0xff]
    %559 = vset.pattern.permute.xlu0 0
    %560 = vperm.xlu0 %559, %v558
    %v561 = vpop.permute.xlu0 %560
    %s562 = smul.u32 0, 4
    %s563 = smul.addr %s562, 8
    %s564 = scalar_lea.vmem [#allocation2], %s563
    %v565 = vld [vmem:[%s564] sm:$0xff]
    %v566 = vld [vmem:[%s564 + $0x8] sm:$0xff]
    %v567 = vld [vmem:[%s564 + $0x10] sm:$0xff]
    %v568 = vld [vmem:[%s564 + $0x18] sm:$0xff]
    %v601 = vunpack.c.l.b16 %v526
    %v602 = vunpack.c.h.b16 %v526
    %v603 = vunpack.c.l.b16 %v527
    %v604 = vunpack.c.h.b16 %v527
    %v605 = vunpack.c.l.b16 %v528
    %v606 = vunpack.c.h.b16 %v528
    %v607 = vunpack.c.l.b16 %v529
    %v608 = vunpack.c.h.b16 %v529
    %v609 = vunpack.c.l.b16 %v530
    %v610 = vunpack.c.h.b16 %v530
    %v611 = vunpack.c.l.b16 %v531
    %v612 = vunpack.c.h.b16 %v531
    %v613 = vunpack.c.l.b16 %v532
    %v614 = vunpack.c.h.b16 %v532
    %v615 = vunpack.c.l.b16 %v533
    %v616 = vunpack.c.h.b16 %v533
    %v617 = vunpack.c.l.b16 %v534
    %v618 = vunpack.c.h.b16 %v534
    %v619 = vunpack.c.l.b16 %v535
    %v620 = vunpack.c.h.b16 %v535
    %v621 = vunpack.c.l.b16 %v536
    %v622 = vunpack.c.h.b16 %v536
    %v623 = vunpack.c.l.b16 %v537
    %v624 = vunpack.c.h.b16 %v537
    %v625 = vunpack.c.l.b16 %v538
    %v626 = vunpack.c.h.b16 %v538
    %v627 = vunpack.c.l.b16 %v539
    %v628 = vunpack.c.h.b16 %v539
    %v629 = vunpack.c.l.b16 %v540
    %v630 = vunpack.c.h.b16 %v540
    %v631 = vunpack.c.l.b16 %v541
    %v632 = vunpack.c.h.b16 %v541
    %v633 = vunpack.c.l.b16 %v542
    %v634 = vunpack.c.h.b16 %v542
    %v635 = vunpack.c.l.b16 %v543
    %v636 = vunpack.c.h.b16 %v543
    %v637 = vunpack.c.l.b16 %v544
    %v638 = vunpack.c.h.b16 %v544
    %v639 = vunpack.c.l.b16 %v545
    %v640 = vunpack.c.h.b16 %v545
    %v641 = vunpack.c.l.b16 %v546
    %v642 = vunpack.c.h.b16 %v546
    %v643 = vunpack.c.l.b16 %v547
    %v644 = vunpack.c.h.b16 %v547
    %v645 = vunpack.c.l.b16 %v548
    %v646 = vunpack.c.h.b16 %v548
    %v647 = vunpack.c.l.b16 %v549
    %v648 = vunpack.c.h.b16 %v549
    %v649 = vunpack.c.l.b16 %v550
    %v650 = vunpack.c.h.b16 %v550
    %v651 = vunpack.c.l.b16 %v551
    %v652 = vunpack.c.h.b16 %v551
    %v653 = vunpack.c.l.b16 %v552
    %v654 = vunpack.c.h.b16 %v552
    %v655 = vunpack.c.l.b16 %v553
    %v656 = vunpack.c.h.b16 %v553
    %v657 = vunpack.c.l.b16 %v554
    %v658 = vunpack.c.h.b16 %v554
    %v659 = vunpack.c.l.b16 %v555
    %v660 = vunpack.c.h.b16 %v555
    %v661 = vunpack.c.l.b16 %v556
    %v662 = vunpack.c.h.b16 %v556
    %v663 = vunpack.c.l.b16 %v557
    %v664 = vunpack.c.h.b16 %v557
    %v665 = vpack.c.b16 %v605, %v601
    %v666 = vpack.c.b16 %v606, %v602
    %v667 = vpack.c.b16 %v607, %v603
    %v668 = vpack.c.b16 %v608, %v604
    %v669 = vpack.c.b16 %v613, %v609
    %v670 = vpack.c.b16 %v614, %v610
    %v671 = vpack.c.b16 %v615, %v611
    %v672 = vpack.c.b16 %v616, %v612
    %v673 = vpack.c.b16 %v621, %v617
    %v674 = vpack.c.b16 %v622, %v618
    %v675 = vpack.c.b16 %v623, %v619
    %v676 = vpack.c.b16 %v624, %v620
    %v677 = vpack.c.b16 %v629, %v625
    %v678 = vpack.c.b16 %v630, %v626
    %v679 = vpack.c.b16 %v631, %v627
    %v680 = vpack.c.b16 %v632, %v628
    %v681 = vpack.c.b16 %v637, %v633
    %v682 = vpack.c.b16 %v638, %v634
    %v683 = vpack.c.b16 %v639, %v635
    %v684 = vpack.c.b16 %v640, %v636
    %v685 = vpack.c.b16 %v645, %v641
    %v686 = vpack.c.b16 %v646, %v642
    %v687 = vpack.c.b16 %v647, %v643
    %v688 = vpack.c.b16 %v648, %v644
    %v689 = vpack.c.b16 %v653, %v649
    %v690 = vpack.c.b16 %v654, %v650
    %v691 = vpack.c.b16 %v655, %v651
    %v692 = vpack.c.b16 %v656, %v652
    %v693 = vpack.c.b16 %v661, %v657
    %v694 = vpack.c.b16 %v662, %v658
    %v695 = vpack.c.b16 %v663, %v659
    %v696 = vpack.c.b16 %v664, %v660
    %729 = vmatprep.subr.bf16.mxu0 %v666
    %730 = vmatpush1.bf16.msra.mxu0 %v665
    %731 = vmatprep.subr.bf16.mxu0 %v670
    %732 = vmatpush1.bf16.msra.mxu0 %v669
    %733 = vmatprep.subr.bf16.mxu0 %v674
    %734 = vmatpush1.bf16.msra.mxu0 %v673
    %735 = vmatprep.subr.bf16.mxu0 %v678
    %736 = vmatpush1.bf16.msra.mxu0 %v677
    %737 = vmatprep.subr.bf16.mxu0 %v682
    %738 = vmatpush1.bf16.msra.mxu0 %v681
    %739 = vmatprep.subr.bf16.mxu0 %v686
    %740 = vmatpush1.bf16.msra.mxu0 %v685
    %741 = vmatprep.subr.bf16.mxu0 %v690
    %742 = vmatpush1.bf16.msra.mxu0 %v689
    %743 = vmatprep.subr.bf16.mxu0 %v694
    %744 = vmatpush1.bf16.msra.mxu0 %v693
    %745 = vmatprep.subr.bf16.mxu0 0
    %746 = vmatpush1.bf16.msra.mxu0 0
    %747 = vmatprep.subr.bf16.mxu0 0
    %748 = vmatpush1.bf16.msra.mxu0 0
    %749 = vmatprep.subr.bf16.mxu0 0
    %750 = vmatpush1.bf16.msra.mxu0 0
    %751 = vmatprep.subr.bf16.mxu0 0
    %752 = vmatpush1.bf16.msra.mxu0 0
    %753 = vmatprep.subr.bf16.mxu0 0
    %754 = vmatpush1.bf16.msra.mxu0 0
    %755 = vmatprep.subr.bf16.mxu0 0
    %756 = vmatpush1.bf16.msra.mxu0 0
    %757 = vmatprep.subr.bf16.mxu0 0
    %758 = vmatpush1.bf16.msra.mxu0 0
    %759 = vmatprep.subr.bf16.mxu0 0
    %760 = vmatpush1.bf16.msra.mxu0 0
    %761 = vmatprep.mubr.bf16.mxu0 0
    %762 = vmatmul.mubr.bf16.gmra.mrb[0].mxu0 0
    %v763 = vpop.f32.mrb[0].mxu0
    %v764 = vadd.f32 %v565, %v763
    %v765 = vpop.f32.mrb[0].mxu0
    %v766 = vadd.f32 %v566, %v765
    %v767 = vpop.f32.mrb[0].mxu0
    %v768 = vpop.f32.mrb[0].mxu0
    %769 = vdwg.mxu0
    %770 = vmatprep.subr.bf16.mxu0 %v668
    %771 = vmatpush1.bf16.msra.mxu0 %v667
    %772 = vmatprep.subr.bf16.mxu0 %v672
    %773 = vmatpush1.bf16.msra.mxu0 %v671
    %774 = vmatprep.subr.bf16.mxu0 %v676
    %775 = vmatpush1.bf16.msra.mxu0 %v675
    %776 = vmatprep.subr.bf16.mxu0 %v680
    %777 = vmatpush1.bf16.msra.mxu0 %v679
    %778 = vmatprep.subr.bf16.mxu0 %v684
    %779 = vmatpush1.bf16.msra.mxu0 %v683
    %780 = vmatprep.subr.bf16.mxu0 %v688
    %781 = vmatpush1.bf16.msra.mxu0 %v687
    %782 = vmatprep.subr.bf16.mxu0 %v692
    %783 = vmatpush1.bf16.msra.mxu0 %v691
    %784 = vmatprep.subr.bf16.mxu0 %v696
    %785 = vmatpush1.bf16.msra.mxu0 %v695
    %786 = vmatprep.subr.bf16.mxu0 0
    %787 = vmatpush1.bf16.msra.mxu0 0
    %788 = vmatprep.subr.bf16.mxu0 0
    %789 = vmatpush1.bf16.msra.mxu0 0
    %790 = vmatprep.subr.bf16.mxu0 0
    %791 = vmatpush1.bf16.msra.mxu0 0
    %792 = vmatprep.subr.bf16.mxu0 0
    %793 = vmatpush1.bf16.msra.mxu0 0
    %794 = vmatprep.subr.bf16.mxu0 0
    %795 = vmatpush1.bf16.msra.mxu0 0
    %796 = vmatprep.subr.bf16.mxu0 0
    %797 = vmatpush1.bf16.msra.mxu0 0
    %798 = vmatprep.subr.bf16.mxu0 0
    %799 = vmatpush1.bf16.msra.mxu0 0
    %800 = vmatprep.subr.bf16.mxu0 0
    %801 = vmatpush1.bf16.msra.mxu0 0
    %802 = vmatprep.mubr.bf16.mxu0 0
    %803 = vmatmul.mubr.bf16.gmra.mrb[0].mxu0 0
    %v804 = vpop.f32.mrb[0].mxu0
    %v805 = vadd.f32 %v567, %v804
    %v806 = vpop.f32.mrb[0].mxu0
    %v807 = vadd.f32 %v568, %v806
    %v808 = vpop.f32.mrb[0].mxu0
    %v809 = vpop.f32.mrb[0].mxu0
    %810 = vdwg.mxu0
    %v811 = vxor.u32 %v764, 2147483648
    %v812 = vmul.f32 %v811, 1.442695
    %v813 = vpow.pop %v812
    %v814 = vadd.f32 %v813, 1.0
    %v815 = vrcp.pop %v814
    %v816 = vmul.f32 1.0, %v815
    %v817 = vxor.u32 %v766, 2147483648
    %v818 = vmul.f32 %v817, 1.442695
    %v819 = vpow.pop %v818
    %v820 = vadd.f32 %v819, 1.0
    %v821 = vrcp.pop %v820
    %v822 = vmul.f32 1.0, %v821
    %v823 = vtanh.pop %v805
    %v824 = vxor.u32 %v807, 2147483648
    %v825 = vmul.f32 %v824, 1.442695
    %v826 = vpow.pop %v825
    %v827 = vadd.f32 %v826, 1.0
    %v828 = vrcp.pop %v827
    %v829 = vmul.f32 1.0, %v828
    %v830 = vmul.f32 %v822, 0.0
    %v831 = vmul.f32 %v816, %v823
    %v832 = vadd.f32 %v830, %v831
    %v833 = vtanh.pop %v832
    %v834 = vmul.f32 %v829, %v833
    %vm835 = vcmp.gt.s32.totalorder %v561, 0
    %v836 = vsel %vm835, %v834, 0.0
    %v837 = vsel %vm835, %v832, 0.0
    %v838 = vpack.c.bf16 %v836, %v836
    %s839 = smul.u32 1, 4
    %s840 = smul.addr %s839, 8
    %s841 = scalar_lea.vmem [#allocation2], %s840
    %v842 = vld [vmem:[%s841] sm:$0xff]
    %v843 = vld [vmem:[%s841 + $0x8] sm:$0xff]
    %v844 = vld [vmem:[%s841 + $0x10] sm:$0xff]
    %v845 = vld [vmem:[%s841 + $0x18] sm:$0xff]
    %846 = vmatprep.subr.bf16.mxu0 %v666
    %847 = vmatpush1.bf16.msra.mxu0 %v665
    %848 = vmatprep.subr.bf16.mxu0 %v670
    %849 = vmatpush1.bf16.msra.mxu0 %v669
    %850 = vmatprep.subr.bf16.mxu0 %v674
    %851 = vmatpush1.bf16.msra.mxu0 %v673
    %852 = vmatprep.subr.bf16.mxu0 %v678
    %853 = vmatpush1.bf16.msra.mxu0 %v677
    %854 = vmatprep.subr.bf16.mxu0 %v682
    %855 = vmatpush1.bf16.msra.mxu0 %v681
    %856 = vmatprep.subr.bf16.mxu0 %v686
    %857 = vmatpush1.bf16.msra.mxu0 %v685
    %858 = vmatprep.subr.bf16.mxu0 %v690
    %859 = vmatpush1.bf16.msra.mxu0 %v689
    %860 = vmatprep.subr.bf16.mxu0 %v694
    %861 = vmatpush1.bf16.msra.mxu0 %v693
    %862 = vmatprep.subr.bf16.mxu0 0
    %863 = vmatpush1.bf16.msra.mxu0 0
    %864 = vmatprep.subr.bf16.mxu0 0
    %865 = vmatpush1.bf16.msra.mxu0 0
    %866 = vmatprep.subr.bf16.mxu0 0
    %867 = vmatpush1.bf16.msra.mxu0 0
    %868 = vmatprep.subr.bf16.mxu0 0
    %869 = vmatpush1.bf16.msra.mxu0 0
    %870 = vmatprep.subr.bf16.mxu0 0
    %871 = vmatpush1.bf16.msra.mxu0 0
    %872 = vmatprep.subr.bf16.mxu0 0
    %873 = vmatpush1.bf16.msra.mxu0 0
    %874 = vmatprep.subr.bf16.mxu0 0
    %875 = vmatpush1.bf16.msra.mxu0 0
    %876 = vmatprep.subr.bf16.mxu0 0
    %877 = vmatpush1.bf16.msra.mxu0 0
    %878 = vmatprep.mubr.bf16.mxu0 0
    %879 = vmatmul.mubr.bf16.gmra.mrb[0].mxu0 %v838
    %v880 = vpop.f32.mrb[0].mxu0
    %v881 = vadd.f32 %v842, %v880
    %v882 = vpop.f32.mrb[0].mxu0
    %v883 = vadd.f32 %v843, %v882
    %v884 = vpop.f32.mrb[0].mxu0
    %v885 = vpop.f32.mrb[0].mxu0
    %886 = vdwg.mxu0
    %887 = vmatprep.subr.bf16.mxu0 %v668
    %888 = vmatpush1.bf16.msra.mxu0 %v667
    %889 = vmatprep.subr.bf16.mxu0 %v672
    %890 = vmatpush1.bf16.msra.mxu0 %v671
    %891 = vmatprep.subr.bf16.mxu0 %v676
    %892 = vmatpush1.bf16.msra.mxu0 %v675
    %893 = vmatprep.subr.bf16.mxu0 %v680
    %894 = vmatpush1.bf16.msra.mxu0 %v679
    %895 = vmatprep.subr.bf16.mxu0 %v684
    %896 = vmatpush1.bf16.msra.mxu0 %v683
    %897 = vmatprep.subr.bf16.mxu0 %v688
    %898 = vmatpush1.bf16.msra.mxu0 %v687
    %899 = vmatprep.subr.bf16.mxu0 %v692
    %900 = vmatpush1.bf16.msra.mxu0 %v691
    %901 = vmatprep.subr.bf16.mxu0 %v696
    %902 = vmatpush1.bf16.msra.mxu0 %v695
    %903 = vmatprep.subr.bf16.mxu0 0
    %904 = vmatpush1.bf16.msra.mxu0 0
    %905 = vmatprep.subr.bf16.mxu0 0
    %906 = vmatpush1.bf16.msra.mxu0 0
    %907 = vmatprep.subr.bf16.mxu0 0
    %908 = vmatpush1.bf16.msra.mxu0 0
    %909 = vmatprep.subr.bf16.mxu0 0
    %910 = vmatpush1.bf16.msra.mxu0 0
    %911 = vmatprep.subr.bf16.mxu0 0
    %912 = vmatpush1.bf16.msra.mxu0 0
    %913 = vmatprep.subr.bf16.mxu0 0
    %914 = vmatpush1.bf16.msra.mxu0 0
    %915 = vmatprep.subr.bf16.mxu0 0
    %916 = vmatpush1.bf16.msra.mxu0 0
    %917 = vmatprep.subr.bf16.mxu0 0
    %918 = vmatpush1.bf16.msra.mxu0 0
    %919 = vmatprep.mubr.bf16.mxu0 0
    %920 = vmatmul.mubr.bf16.gmra.mrb[0].mxu0 %v838
    %v921 = vpop.f32.mrb[0].mxu0
    %v922 = vadd.f32 %v844, %v921
    %v923 = vpop.f32.mrb[0].mxu0
    %v924 = vadd.f32 %v845, %v923
    %v925 = vpop.f32.mrb[0].mxu0
    %v926 = vpop.f32.mrb[0].mxu0
    %927 = vdwg.mxu0
    %v928 = vxor.u32 %v881, 2147483648
    %v929 = vmul.f32 %v928, 1.442695
    %v930 = vpow.pop %v929
    %v931 = vadd.f32 %v930, 1.0
    %v932 = vrcp.pop %v931
    %v933 = vmul.f32 1.0, %v932
    %v934 = vxor.u32 %v883, 2147483648
    %v935 = vmul.f32 %v934, 1.442695
    %v936 = vpow.pop %v935
    %v937 = vadd.f32 %v936, 1.0
    %v938 = vrcp.pop %v937
    %v939 = vmul.f32 1.0, %v938
    %v940 = vtanh.pop %v922
    %v941 = vxor.u32 %v924, 2147483648
    %v942 = vmul.f32 %v941, 1.442695
    %v943 = vpow.pop %v942
    %v944 = vadd.f32 %v943, 1.0
    %v945 = vrcp.pop %v944
    %v946 = vmul.f32 1.0, %v945
    %v947 = vmul.f32 %v939, %v837
    %v948 = vmul.f32 %v933, %v940
    %v949 = vadd.f32 %v947, %v948
    %v950 = vtanh.pop %v949
    %v951 = vmul.f32 %v946, %v950
    %vm952 = vcmp.gt.s32.totalorder %v561, 1
    %v953 = vsel %vm952, %v951, %v836
    %v954 = vsel %vm952, %v949, %v837
    %v955 = vpack.c.bf16 %v953, %v953
    %s956 = smul.u32 2, 4
    %s957 = smul.addr %s956, 8
    %s958 = scalar_lea.vmem [#allocation2], %s957
    %v959 = vld [vmem:[%s958] sm:$0xff]
    %v960 = vld [vmem:[%s958 + $0x8] sm:$0xff]
    %v961 = vld [vmem:[%s958 + $0x10] sm:$0xff]
    %v962 = vld [vmem:[%s958 + $0x18] sm:$0xff]
    %963 = vmatprep.subr.bf16.mxu0 %v666
    %964 = vmatpush1.bf16.msra.mxu0 %v665
    %965 = vmatprep.subr.bf16.mxu0 %v670
    %966 = vmatpush1.bf16.msra.mxu0 %v669
    %967 = vmatprep.subr.bf16.mxu0 %v674
    %968 = vmatpush1.bf16.msra.mxu0 %v673
    %969 = vmatprep.subr.bf16.mxu0 %v678
    %970 = vmatpush1.bf16.msra.mxu0 %v677
    %971 = vmatprep.subr.bf16.mxu0 %v682
    %972 = vmatpush1.bf16.msra.mxu0 %v681
    %973 = vmatprep.subr.bf16.mxu0 %v686
    %974 = vmatpush1.bf16.msra.mxu0 %v685
    %975 = vmatprep.subr.bf16.mxu0 %v690
    %976 = vmatpush1.bf16.msra.mxu0 %v689
    %977 = vmatprep.subr.bf16.mxu0 %v694
    %978 = vmatpush1.bf16.msra.mxu0 %v693
    %979 = vmatprep.subr.bf16.mxu0 0
    %980 = vmatpush1.bf16.msra.mxu0 0
    %981 = vmatprep.subr.bf16.mxu0 0
    %982 = vmatpush1.bf16.msra.mxu0 0
    %983 = vmatprep.subr.bf16.mxu0 0
    %984 = vmatpush1.bf16.msra.mxu0 0
    %985 = vmatprep.subr.bf16.mxu0 0
    %986 = vmatpush1.bf16.msra.mxu0 0
    %987 = vmatprep.subr.bf16.mxu0 0
    %988 = vmatpush1.bf16.msra.mxu0 0
    %989 = vmatprep.subr.bf16.mxu0 0
    %990 = vmatpush1.bf16.msra.mxu0 0
    %991 = vmatprep.subr.bf16.mxu0 0
    %992 = vmatpush1.bf16.msra.mxu0 0
    %993 = vmatprep.subr.bf16.mxu0 0
    %994 = vmatpush1.bf16.msra.mxu0 0
    %995 = vmatprep.mubr.bf16.mxu0 0
    %996 = vmatmul.mubr.bf16.gmra.mrb[0].mxu0 %v955
    %v997 = vpop.f32.mrb[0].mxu0
    %v998 = vadd.f32 %v959, %v997
    %v999 = vpop.f32.mrb[0].mxu0
    %v1000 = vadd.f32 %v960, %v999
    %v1001 = vpop.f32.mrb[0].mxu0
    %v1002 = vpop.f32.mrb[0].mxu0
    %1003 = vdwg.mxu0
    %1004 = vmatprep.subr.bf16.mxu0 %v668
    %1005 = vmatpush1.bf16.msra.mxu0 %v667
    %1006 = vmatprep.subr.bf16.mxu0 %v672
    %1007 = vmatpush1.bf16.msra.mxu0 %v671
    %1008 = vmatprep.subr.bf16.mxu0 %v676
    %1009 = vmatpush1.bf16.msra.mxu0 %v675
    %1010 = vmatprep.subr.bf16.mxu0 %v680
    %1011 = vmatpush1.bf16.msra.mxu0 %v679
    %1012 = vmatprep.subr.bf16.mxu0 %v684
    %1013 = vmatpush1.bf16.msra.mxu0 %v683
    %1014 = vmatprep.subr.bf16.mxu0 %v688
    %1015 = vmatpush1.bf16.msra.mxu0 %v687
    %1016 = vmatprep.subr.bf16.mxu0 %v692
    %1017 = vmatpush1.bf16.msra.mxu0 %v691
    %1018 = vmatprep.subr.bf16.mxu0 %v696
    %1019 = vmatpush1.bf16.msra.mxu0 %v695
    %1020 = vmatprep.subr.bf16.mxu0 0
    %1021 = vmatpush1.bf16.msra.mxu0 0
    %1022 = vmatprep.subr.bf16.mxu0 0
    %1023 = vmatpush1.bf16.msra.mxu0 0
    %1024 = vmatprep.subr.bf16.mxu0 0
    %1025 = vmatpush1.bf16.msra.mxu0 0
    %1026 = vmatprep.subr.bf16.mxu0 0
    %1027 = vmatpush1.bf16.msra.mxu0 0
    %1028 = vmatprep.subr.bf16.mxu0 0
    %1029 = vmatpush1.bf16.msra.mxu0 0
    %1030 = vmatprep.subr.bf16.mxu0 0
    %1031 = vmatpush1.bf16.msra.mxu0 0
    %1032 = vmatprep.subr.bf16.mxu0 0
    %1033 = vmatpush1.bf16.msra.mxu0 0
    %1034 = vmatprep.subr.bf16.mxu0 0
    %1035 = vmatpush1.bf16.msra.mxu0 0
    %1036 = vmatprep.mubr.bf16.mxu0 0
    %1037 = vmatmul.mubr.bf16.gmra.mrb[0].mxu0 %v955
    %v1038 = vpop.f32.mrb[0].mxu0
    %v1039 = vadd.f32 %v961, %v1038
    %v1040 = vpop.f32.mrb[0].mxu0
    %v1041 = vadd.f32 %v962, %v1040
    %v1042 = vpop.f32.mrb[0].mxu0
    %v1043 = vpop.f32.mrb[0].mxu0
    %1044 = vdwg.mxu0
    %v1045 = vxor.u32 %v998, 2147483648
    %v1046 = vmul.f32 %v1045, 1.442695
    %v1047 = vpow.pop %v1046
    %v1048 = vadd.f32 %v1047, 1.0
    %v1049 = vrcp.pop %v1048
    %v1050 = vmul.f32 1.0, %v1049
    %v1051 = vxor.u32 %v1000, 2147483648
    %v1052 = vmul.f32 %v1051, 1.442695
    %v1053 = vpow.pop %v1052
    %v1054 = vadd.f32 %v1053, 1.0
    %v1055 = vrcp.pop %v1054
    %v1056 = vmul.f32 1.0, %v1055
    %v1057 = vtanh.pop %v1039
    %v1058 = vxor.u32 %v1041, 2147483648
    %v1059 = vmul.f32 %v1058, 1.442695
    %v1060 = vpow.pop %v1059
    %v1061 = vadd.f32 %v1060, 1.0
    %v1062 = vrcp.pop %v1061
    %v1063 = vmul.f32 1.0, %v1062
    %v1064 = vmul.f32 %v1056, %v954
    %v1065 = vmul.f32 %v1050, %v1057
    %v1066 = vadd.f32 %v1064, %v1065
    %v1067 = vtanh.pop %v1066
    %v1068 = vmul.f32 %v1063, %v1067
    %vm1069 = vcmp.gt.s32.totalorder %v561, 2
    %v1070 = vsel %vm1069, %v1068, %v953
    %v1071 = vsel %vm1069, %v1066, %v954
    %v1072 = vpack.c.bf16 %v1070, %v1070
    %s1073 = smul.u32 3, 4
    %s1074 = smul.addr %s1073, 8
    %s1075 = scalar_lea.vmem [#allocation2], %s1074
    %v1076 = vld [vmem:[%s1075] sm:$0xff]
    %v1077 = vld [vmem:[%s1075 + $0x8] sm:$0xff]
    %v1078 = vld [vmem:[%s1075 + $0x10] sm:$0xff]
    %v1079 = vld [vmem:[%s1075 + $0x18] sm:$0xff]
    %1080 = vmatprep.subr.bf16.mxu0 %v666
    %1081 = vmatpush1.bf16.msra.mxu0 %v665
    %1082 = vmatprep.subr.bf16.mxu0 %v670
    %1083 = vmatpush1.bf16.msra.mxu0 %v669
    %1084 = vmatprep.subr.bf16.mxu0 %v674
    %1085 = vmatpush1.bf16.msra.mxu0 %v673
    %1086 = vmatprep.subr.bf16.mxu0 %v678
    %1087 = vmatpush1.bf16.msra.mxu0 %v677
    %1088 = vmatprep.subr.bf16.mxu0 %v682
    %1089 = vmatpush1.bf16.msra.mxu0 %v681
    %1090 = vmatprep.subr.bf16.mxu0 %v686
    %1091 = vmatpush1.bf16.msra.mxu0 %v685
    %1092 = vmatprep.subr.bf16.mxu0 %v690
    %1093 = vmatpush1.bf16.msra.mxu0 %v689
    %1094 = vmatprep.subr.bf16.mxu0 %v694
    %1095 = vmatpush1.bf16.msra.mxu0 %v693
    %1096 = vmatprep.subr.bf16.mxu0 0
    %1097 = vmatpush1.bf16.msra.mxu0 0
    %1098 = vmatprep.subr.bf16.mxu0 0
    %1099 = vmatpush1.bf16.msra.mxu0 0
    %1100 = vmatprep.subr.bf16.mxu0 0
    %1101 = vmatpush1.bf16.msra.mxu0 0
    %1102 = vmatprep.subr.bf16.mxu0 0
    %1103 = vmatpush1.bf16.msra.mxu0 0
    %1104 = vmatprep.subr.bf16.mxu0 0
    %1105 = vmatpush1.bf16.msra.mxu0 0
    %1106 = vmatprep.subr.bf16.mxu0 0
    %1107 = vmatpush1.bf16.msra.mxu0 0
    %1108 = vmatprep.subr.bf16.mxu0 0
    %1109 = vmatpush1.bf16.msra.mxu0 0
    %1110 = vmatprep.subr.bf16.mxu0 0
    %1111 = vmatpush1.bf16.msra.mxu0 0
    %1112 = vmatprep.mubr.bf16.mxu0 0
    %1113 = vmatmul.mubr.bf16.gmra.mrb[0].mxu0 %v1072
    %v1114 = vpop.f32.mrb[0].mxu0
    %v1115 = vadd.f32 %v1076, %v1114
    %v1116 = vpop.f32.mrb[0].mxu0
    %v1117 = vadd.f32 %v1077, %v1116
    %v1118 = vpop.f32.mrb[0].mxu0
    %v1119 = vpop.f32.mrb[0].mxu0
    %1120 = vdwg.mxu0
    %1121 = vmatprep.subr.bf16.mxu0 %v668
    %1122 = vmatpush1.bf16.msra.mxu0 %v667
    %1123 = vmatprep.subr.bf16.mxu0 %v672
    %1124 = vmatpush1.bf16.msra.mxu0 %v671
    %1125 = vmatprep.subr.bf16.mxu0 %v676
    %1126 = vmatpush1.bf16.msra.mxu0 %v675
    %1127 = vmatprep.subr.bf16.mxu0 %v680
    %1128 = vmatpush1.bf16.msra.mxu0 %v679
    %1129 = vmatprep.subr.bf16.mxu0 %v684
    %1130 = vmatpush1.bf16.msra.mxu0 %v683
    %1131 = vmatprep.subr.bf16.mxu0 %v688
    %1132 = vmatpush1.bf16.msra.mxu0 %v687
    %1133 = vmatprep.subr.bf16.mxu0 %v692
    %1134 = vmatpush1.bf16.msra.mxu0 %v691
    %1135 = vmatprep.subr.bf16.mxu0 %v696
    %1136 = vmatpush1.bf16.msra.mxu0 %v695
    %1137 = vmatprep.subr.bf16.mxu0 0
    %1138 = vmatpush1.bf16.msra.mxu0 0
    %1139 = vmatprep.subr.bf16.mxu0 0
    %1140 = vmatpush1.bf16.msra.mxu0 0
    %1141 = vmatprep.subr.bf16.mxu0 0
    %1142 = vmatpush1.bf16.msra.mxu0 0
    %1143 = vmatprep.subr.bf16.mxu0 0
    %1144 = vmatpush1.bf16.msra.mxu0 0
    %1145 = vmatprep.subr.bf16.mxu0 0
    %1146 = vmatpush1.bf16.msra.mxu0 0
    %1147 = vmatprep.subr.bf16.mxu0 0
    %1148 = vmatpush1.bf16.msra.mxu0 0
    %1149 = vmatprep.subr.bf16.mxu0 0
    %1150 = vmatpush1.bf16.msra.mxu0 0
    %1151 = vmatprep.subr.bf16.mxu0 0
    %1152 = vmatpush1.bf16.msra.mxu0 0
    %1153 = vmatprep.mubr.bf16.mxu0 0
    %1154 = vmatmul.mubr.bf16.gmra.mrb[0].mxu0 %v1072
    %v1155 = vpop.f32.mrb[0].mxu0
    %v1156 = vadd.f32 %v1078, %v1155
    %v1157 = vpop.f32.mrb[0].mxu0
    %v1158 = vadd.f32 %v1079, %v1157
    %v1159 = vpop.f32.mrb[0].mxu0
    %v1160 = vpop.f32.mrb[0].mxu0
    %1161 = vdwg.mxu0
    %v1162 = vxor.u32 %v1115, 2147483648
    %v1163 = vmul.f32 %v1162, 1.442695
    %v1164 = vpow.pop %v1163
    %v1165 = vadd.f32 %v1164, 1.0
    %v1166 = vrcp.pop %v1165
    %v1167 = vmul.f32 1.0, %v1166
    %v1168 = vxor.u32 %v1117, 2147483648
    %v1169 = vmul.f32 %v1168, 1.442695
    %v1170 = vpow.pop %v1169
    %v1171 = vadd.f32 %v1170, 1.0
    %v1172 = vrcp.pop %v1171
    %v1173 = vmul.f32 1.0, %v1172
    %v1174 = vtanh.pop %v1156
    %v1175 = vxor.u32 %v1158, 2147483648
    %v1176 = vmul.f32 %v1175, 1.442695
    %v1177 = vpow.pop %v1176
    %v1178 = vadd.f32 %v1177, 1.0
    %v1179 = vrcp.pop %v1178
    %v1180 = vmul.f32 1.0, %v1179
    %v1181 = vmul.f32 %v1173, %v1071
    %v1182 = vmul.f32 %v1167, %v1174
    %v1183 = vadd.f32 %v1181, %v1182
    %v1184 = vtanh.pop %v1183
    %v1185 = vmul.f32 %v1180, %v1184
    %vm1186 = vcmp.gt.s32.totalorder %v561, 3
    %v1187 = vsel %vm1186, %v1185, %v1070
    %v1188 = vsel %vm1186, %v1183, %v1071
    %v1189 = vpack.c.bf16 %v1187, %v1187
    %s1190 = smul.u32 4, 4
    %s1191 = smul.addr %s1190, 8
    %s1192 = scalar_lea.vmem [#allocation2], %s1191
    %v1193 = vld [vmem:[%s1192] sm:$0xff]
    %v1194 = vld [vmem:[%s1192 + $0x8] sm:$0xff]
    %v1195 = vld [vmem:[%s1192 + $0x10] sm:$0xff]
    %v1196 = vld [vmem:[%s1192 + $0x18] sm:$0xff]
    %1197 = vmatprep.subr.bf16.mxu0 %v666
    %1198 = vmatpush1.bf16.msra.mxu0 %v665
    %1199 = vmatprep.subr.bf16.mxu0 %v670
    %1200 = vmatpush1.bf16.msra.mxu0 %v669
    %1201 = vmatprep.subr.bf16.mxu0 %v674
    %1202 = vmatpush1.bf16.msra.mxu0 %v673
    %1203 = vmatprep.subr.bf16.mxu0 %v678
    %1204 = vmatpush1.bf16.msra.mxu0 %v677
    %1205 = vmatprep.subr.bf16.mxu0 %v682
    %1206 = vmatpush1.bf16.msra.mxu0 %v681
    %1207 = vmatprep.subr.bf16.mxu0 %v686
    %1208 = vmatpush1.bf16.msra.mxu0 %v685
    %1209 = vmatprep.subr.bf16.mxu0 %v690
    %1210 = vmatpush1.bf16.msra.mxu0 %v689
    %1211 = vmatprep.subr.bf16.mxu0 %v694
    %1212 = vmatpush1.bf16.msra.mxu0 %v693
    %1213 = vmatprep.subr.bf16.mxu0 0
    %1214 = vmatpush1.bf16.msra.mxu0 0
    %1215 = vmatprep.subr.bf16.mxu0 0
    %1216 = vmatpush1.bf16.msra.mxu0 0
    %1217 = vmatprep.subr.bf16.mxu0 0
    %1218 = vmatpush1.bf16.msra.mxu0 0
    %1219 = vmatprep.subr.bf16.mxu0 0
    %1220 = vmatpush1.bf16.msra.mxu0 0
    %1221 = vmatprep.subr.bf16.mxu0 0
    %1222 = vmatpush1.bf16.msra.mxu0 0
    %1223 = vmatprep.subr.bf16.mxu0 0
    %1224 = vmatpush1.bf16.msra.mxu0 0
    %1225 = vmatprep.subr.bf16.mxu0 0
    %1226 = vmatpush1.bf16.msra.mxu0 0
    %1227 = vmatprep.subr.bf16.mxu0 0
    %1228 = vmatpush1.bf16.msra.mxu0 0
    %1229 = vmatprep.mubr.bf16.mxu0 0
    %1230 = vmatmul.mubr.bf16.gmra.mrb[0].mxu0 %v1189
    %v1231 = vpop.f32.mrb[0].mxu0
    %v1232 = vadd.f32 %v1193, %v1231
    %v1233 = vpop.f32.mrb[0].mxu0
    %v1234 = vadd.f32 %v1194, %v1233
    %v1235 = vpop.f32.mrb[0].mxu0
    %v1236 = vpop.f32.mrb[0].mxu0
    %1237 = vdwg.mxu0
    %1238 = vmatprep.subr.bf16.mxu0 %v668
    %1239 = vmatpush1.bf16.msra.mxu0 %v667
    %1240 = vmatprep.subr.bf16.mxu0 %v672
    %1241 = vmatpush1.bf16.msra.mxu0 %v671
    %1242 = vmatprep.subr.bf16.mxu0 %v676
    %1243 = vmatpush1.bf16.msra.mxu0 %v675
    %1244 = vmatprep.subr.bf16.mxu0 %v680
    %1245 = vmatpush1.bf16.msra.mxu0 %v679
    %1246 = vmatprep.subr.bf16.mxu0 %v684
    %1247 = vmatpush1.bf16.msra.mxu0 %v683
    %1248 = vmatprep.subr.bf16.mxu0 %v688
    %1249 = vmatpush1.bf16.msra.mxu0 %v687
    %1250 = vmatprep.subr.bf16.mxu0 %v692
    %1251 = vmatpush1.bf16.msra.mxu0 %v691
    %1252 = vmatprep.subr.bf16.mxu0 %v696
    %1253 = vmatpush1.bf16.msra.mxu0 %v695
    %1254 = vmatprep.subr.bf16.mxu0 0
    %1255 = vmatpush1.bf16.msra.mxu0 0
    %1256 = vmatprep.subr.bf16.mxu0 0
    %1257 = vmatpush1.bf16.msra.mxu0 0
    %1258 = vmatprep.subr.bf16.mxu0 0
    %1259 = vmatpush1.bf16.msra.mxu0 0
    %1260 = vmatprep.subr.bf16.mxu0 0
    %1261 = vmatpush1.bf16.msra.mxu0 0
    %1262 = vmatprep.subr.bf16.mxu0 0
    %1263 = vmatpush1.bf16.msra.mxu0 0
    %1264 = vmatprep.subr.bf16.mxu0 0
    %1265 = vmatpush1.bf16.msra.mxu0 0
    %1266 = vmatprep.subr.bf16.mxu0 0
    %1267 = vmatpush1.bf16.msra.mxu0 0
    %1268 = vmatprep.subr.bf16.mxu0 0
    %1269 = vmatpush1.bf16.msra.mxu0 0
    %1270 = vmatprep.mubr.bf16.mxu0 0
    %1271 = vmatmul.mubr.bf16.gmra.mrb[0].mxu0 %v1189
    %v1272 = vpop.f32.mrb[0].mxu0
    %v1273 = vadd.f32 %v1195, %v1272
    %v1274 = vpop.f32.mrb[0].mxu0
    %v1275 = vadd.f32 %v1196, %v1274
    %v1276 = vpop.f32.mrb[0].mxu0
    %v1277 = vpop.f32.mrb[0].mxu0
    %1278 = vdwg.mxu0
    %v1279 = vxor.u32 %v1232, 2147483648
    %v1280 = vmul.f32 %v1279, 1.442695
    %v1281 = vpow.pop %v1280
    %v1282 = vadd.f32 %v1281, 1.0
    %v1283 = vrcp.pop %v1282
    %v1284 = vmul.f32 1.0, %v1283
    %v1285 = vxor.u32 %v1234, 2147483648
    %v1286 = vmul.f32 %v1285, 1.442695
    %v1287 = vpow.pop %v1286
    %v1288 = vadd.f32 %v1287, 1.0
    %v1289 = vrcp.pop %v1288
    %v1290 = vmul.f32 1.0, %v1289
    %v1291 = vtanh.pop %v1273
    %v1292 = vxor.u32 %v1275, 2147483648
    %v1293 = vmul.f32 %v1292, 1.442695
    %v1294 = vpow.pop %v1293
    %v1295 = vadd.f32 %v1294, 1.0
    %v1296 = vrcp.pop %v1295
    %v1297 = vmul.f32 1.0, %v1296
    %v1298 = vmul.f32 %v1290, %v1188
    %v1299 = vmul.f32 %v1284, %v1291
    %v1300 = vadd.f32 %v1298, %v1299
    %v1301 = vtanh.pop %v1300
    %v1302 = vmul.f32 %v1297, %v1301
    %vm1303 = vcmp.gt.s32.totalorder %v561, 4
    %v1304 = vsel %vm1303, %v1302, %v1187
    %v1305 = vsel %vm1303, %v1300, %v1188
    %v1306 = vpack.c.bf16 %v1304, %v1304
    %s1307 = smul.u32 5, 4
    %s1308 = smul.addr %s1307, 8
    %s1309 = scalar_lea.vmem [#allocation2], %s1308
    %v1310 = vld [vmem:[%s1309] sm:$0xff]
    %v1311 = vld [vmem:[%s1309 + $0x8] sm:$0xff]
    %v1312 = vld [vmem:[%s1309 + $0x10] sm:$0xff]
    %v1313 = vld [vmem:[%s1309 + $0x18] sm:$0xff]
    %1314 = vmatprep.subr.bf16.mxu0 %v666
    %1315 = vmatpush1.bf16.msra.mxu0 %v665
    %1316 = vmatprep.subr.bf16.mxu0 %v670
    %1317 = vmatpush1.bf16.msra.mxu0 %v669
    %1318 = vmatprep.subr.bf16.mxu0 %v674
    %1319 = vmatpush1.bf16.msra.mxu0 %v673
    %1320 = vmatprep.subr.bf16.mxu0 %v678
    %1321 = vmatpush1.bf16.msra.mxu0 %v677
    %1322 = vmatprep.subr.bf16.mxu0 %v682
    %1323 = vmatpush1.bf16.msra.mxu0 %v681
    %1324 = vmatprep.subr.bf16.mxu0 %v686
    %1325 = vmatpush1.bf16.msra.mxu0 %v685
    %1326 = vmatprep.subr.bf16.mxu0 %v690
    %1327 = vmatpush1.bf16.msra.mxu0 %v689
    %1328 = vmatprep.subr.bf16.mxu0 %v694
    %1329 = vmatpush1.bf16.msra.mxu0 %v693
    %1330 = vmatprep.subr.bf16.mxu0 0
    %1331 = vmatpush1.bf16.msra.mxu0 0
    %1332 = vmatprep.subr.bf16.mxu0 0
    %1333 = vmatpush1.bf16.msra.mxu0 0
    %1334 = vmatprep.subr.bf16.mxu0 0
    %1335 = vmatpush1.bf16.msra.mxu0 0
    %1336 = vmatprep.subr.bf16.mxu0 0
    %1337 = vmatpush1.bf16.msra.mxu0 0
    %1338 = vmatprep.subr.bf16.mxu0 0
    %1339 = vmatpush1.bf16.msra.mxu0 0
    %1340 = vmatprep.subr.bf16.mxu0 0
    %1341 = vmatpush1.bf16.msra.mxu0 0
    %1342 = vmatprep.subr.bf16.mxu0 0
    %1343 = vmatpush1.bf16.msra.mxu0 0
    %1344 = vmatprep.subr.bf16.mxu0 0
    %1345 = vmatpush1.bf16.msra.mxu0 0
    %1346 = vmatprep.mubr.bf16.mxu0 0
    %1347 = vmatmul.mubr.bf16.gmra.mrb[0].mxu0 %v1306
    %v1348 = vpop.f32.mrb[0].mxu0
    %v1349 = vadd.f32 %v1310, %v1348
    %v1350 = vpop.f32.mrb[0].mxu0
    %v1351 = vadd.f32 %v1311, %v1350
    %v1352 = vpop.f32.mrb[0].mxu0
    %v1353 = vpop.f32.mrb[0].mxu0
    %1354 = vdwg.mxu0
    %1355 = vmatprep.subr.bf16.mxu0 %v668
    %1356 = vmatpush1.bf16.msra.mxu0 %v667
    %1357 = vmatprep.subr.bf16.mxu0 %v672
    %1358 = vmatpush1.bf16.msra.mxu0 %v671
    %1359 = vmatprep.subr.bf16.mxu0 %v676
    %1360 = vmatpush1.bf16.msra.mxu0 %v675
    %1361 = vmatprep.subr.bf16.mxu0 %v680
    %1362 = vmatpush1.bf16.msra.mxu0 %v679
    %1363 = vmatprep.subr.bf16.mxu0 %v684
    %1364 = vmatpush1.bf16.msra.mxu0 %v683
    %1365 = vmatprep.subr.bf16.mxu0 %v688
    %1366 = vmatpush1.bf16.msra.mxu0 %v687
    %1367 = vmatprep.subr.bf16.mxu0 %v692
    %1368 = vmatpush1.bf16.msra.mxu0 %v691
    %1369 = vmatprep.subr.bf16.mxu0 %v696
    %1370 = vmatpush1.bf16.msra.mxu0 %v695
    %1371 = vmatprep.subr.bf16.mxu0 0
    %1372 = vmatpush1.bf16.msra.mxu0 0
    %1373 = vmatprep.subr.bf16.mxu0 0
    %1374 = vmatpush1.bf16.msra.mxu0 0
    %1375 = vmatprep.subr.bf16.mxu0 0
    %1376 = vmatpush1.bf16.msra.mxu0 0
    %1377 = vmatprep.subr.bf16.mxu0 0
    %1378 = vmatpush1.bf16.msra.mxu0 0
    %1379 = vmatprep.subr.bf16.mxu0 0
    %1380 = vmatpush1.bf16.msra.mxu0 0
    %1381 = vmatprep.subr.bf16.mxu0 0
    %1382 = vmatpush1.bf16.msra.mxu0 0
    %1383 = vmatprep.subr.bf16.mxu0 0
    %1384 = vmatpush1.bf16.msra.mxu0 0
    %1385 = vmatprep.subr.bf16.mxu0 0
    %1386 = vmatpush1.bf16.msra.mxu0 0
    %1387 = vmatprep.mubr.bf16.mxu0 0
    %1388 = vmatmul.mubr.bf16.gmra.mrb[0].mxu0 %v1306
    %v1389 = vpop.f32.mrb[0].mxu0
    %v1390 = vadd.f32 %v1312, %v1389
    %v1391 = vpop.f32.mrb[0].mxu0
    %v1392 = vadd.f32 %v1313, %v1391
    %v1393 = vpop.f32.mrb[0].mxu0
    %v1394 = vpop.f32.mrb[0].mxu0
    %1395 = vdwg.mxu0
    %v1396 = vxor.u32 %v1349, 2147483648
    %v1397 = vmul.f32 %v1396, 1.442695
    %v1398 = vpow.pop %v1397
    %v1399 = vadd.f32 %v1398, 1.0
    %v1400 = vrcp.pop %v1399
    %v1401 = vmul.f32 1.0, %v1400
    %v1402 = vxor.u32 %v1351, 2147483648
    %v1403 = vmul.f32 %v1402, 1.442695
    %v1404 = vpow.pop %v1403
    %v1405 = vadd.f32 %v1404, 1.0
    %v1406 = vrcp.pop %v1405
    %v1407 = vmul.f32 1.0, %v1406
    %v1408 = vtanh.pop %v1390
    %v1409 = vxor.u32 %v1392, 2147483648
    %v1410 = vmul.f32 %v1409, 1.442695
    %v1411 = vpow.pop %v1410
    %v1412 = vadd.f32 %v1411, 1.0
    %v1413 = vrcp.pop %v1412
    %v1414 = vmul.f32 1.0, %v1413
    %v1415 = vmul.f32 %v1407, %v1305
    %v1416 = vmul.f32 %v1401, %v1408
    %v1417 = vadd.f32 %v1415, %v1416
    %v1418 = vtanh.pop %v1417
    %v1419 = vmul.f32 %v1414, %v1418
    %vm1420 = vcmp.gt.s32.totalorder %v561, 5
    %v1421 = vsel %vm1420, %v1419, %v1304
    %v1422 = vsel %vm1420, %v1417, %v1305
    %v1423 = vpack.c.bf16 %v1421, %v1421
    %s1424 = smul.u32 6, 4
    %s1425 = smul.addr %s1424, 8
    %s1426 = scalar_lea.vmem [#allocation2], %s1425
    %v1427 = vld [vmem:[%s1426] sm:$0xff]
    %v1428 = vld [vmem:[%s1426 + $0x8] sm:$0xff]
    %v1429 = vld [vmem:[%s1426 + $0x10] sm:$0xff]
    %v1430 = vld [vmem:[%s1426 + $0x18] sm:$0xff]
    %1431 = vmatprep.subr.bf16.mxu0 %v666
    %1432 = vmatpush1.bf16.msra.mxu0 %v665
    %1433 = vmatprep.subr.bf16.mxu0 %v670
    %1434 = vmatpush1.bf16.msra.mxu0 %v669
    %1435 = vmatprep.subr.bf16.mxu0 %v674
    %1436 = vmatpush1.bf16.msra.mxu0 %v673
    %1437 = vmatprep.subr.bf16.mxu0 %v678
    %1438 = vmatpush1.bf16.msra.mxu0 %v677
    %1439 = vmatprep.subr.bf16.mxu0 %v682
    %1440 = vmatpush1.bf16.msra.mxu0 %v681
    %1441 = vmatprep.subr.bf16.mxu0 %v686
    %1442 = vmatpush1.bf16.msra.mxu0 %v685
    %1443 = vmatprep.subr.bf16.mxu0 %v690
    %1444 = vmatpush1.bf16.msra.mxu0 %v689
    %1445 = vmatprep.subr.bf16.mxu0 %v694
    %1446 = vmatpush1.bf16.msra.mxu0 %v693
    %1447 = vmatprep.subr.bf16.mxu0 0
    %1448 = vmatpush1.bf16.msra.mxu0 0
    %1449 = vmatprep.subr.bf16.mxu0 0
    %1450 = vmatpush1.bf16.msra.mxu0 0
    %1451 = vmatprep.subr.bf16.mxu0 0
    %1452 = vmatpush1.bf16.msra.mxu0 0
    %1453 = vmatprep.subr.bf16.mxu0 0
    %1454 = vmatpush1.bf16.msra.mxu0 0
    %1455 = vmatprep.subr.bf16.mxu0 0
    %1456 = vmatpush1.bf16.msra.mxu0 0
    %1457 = vmatprep.subr.bf16.mxu0 0
    %1458 = vmatpush1.bf16.msra.mxu0 0
    %1459 = vmatprep.subr.bf16.mxu0 0
    %1460 = vmatpush1.bf16.msra.mxu0 0
    %1461 = vmatprep.subr.bf16.mxu0 0
    %1462 = vmatpush1.bf16.msra.mxu0 0
    %1463 = vmatprep.mubr.bf16.mxu0 0
    %1464 = vmatmul.mubr.bf16.gmra.mrb[0].mxu0 %v1423
    %v1465 = vpop.f32.mrb[0].mxu0
    %v1466 = vadd.f32 %v1427, %v1465
    %v1467 = vpop.f32.mrb[0].mxu0
    %v1468 = vadd.f32 %v1428, %v1467
    %v1469 = vpop.f32.mrb[0].mxu0
    %v1470 = vpop.f32.mrb[0].mxu0
    %1471 = vdwg.mxu0
    %1472 = vmatprep.subr.bf16.mxu0 %v668
    %1473 = vmatpush1.bf16.msra.mxu0 %v667
    %1474 = vmatprep.subr.bf16.mxu0 %v672
    %1475 = vmatpush1.bf16.msra.mxu0 %v671
    %1476 = vmatprep.subr.bf16.mxu0 %v676
    %1477 = vmatpush1.bf16.msra.mxu0 %v675
    %1478 = vmatprep.subr.bf16.mxu0 %v680
    %1479 = vmatpush1.bf16.msra.mxu0 %v679
    %1480 = vmatprep.subr.bf16.mxu0 %v684
    %1481 = vmatpush1.bf16.msra.mxu0 %v683
    %1482 = vmatprep.subr.bf16.mxu0 %v688
    %1483 = vmatpush1.bf16.msra.mxu0 %v687
    %1484 = vmatprep.subr.bf16.mxu0 %v692
    %1485 = vmatpush1.bf16.msra.mxu0 %v691
    %1486 = vmatprep.subr.bf16.mxu0 %v696
    %1487 = vmatpush1.bf16.msra.mxu0 %v695
    %1488 = vmatprep.subr.bf16.mxu0 0
    %1489 = vmatpush1.bf16.msra.mxu0 0
    %1490 = vmatprep.subr.bf16.mxu0 0
    %1491 = vmatpush1.bf16.msra.mxu0 0
    %1492 = vmatprep.subr.bf16.mxu0 0
    %1493 = vmatpush1.bf16.msra.mxu0 0
    %1494 = vmatprep.subr.bf16.mxu0 0
    %1495 = vmatpush1.bf16.msra.mxu0 0
    %1496 = vmatprep.subr.bf16.mxu0 0
    %1497 = vmatpush1.bf16.msra.mxu0 0
    %1498 = vmatprep.subr.bf16.mxu0 0
    %1499 = vmatpush1.bf16.msra.mxu0 0
    %1500 = vmatprep.subr.bf16.mxu0 0
    %1501 = vmatpush1.bf16.msra.mxu0 0
    %1502 = vmatprep.subr.bf16.mxu0 0
    %1503 = vmatpush1.bf16.msra.mxu0 0
    %1504 = vmatprep.mubr.bf16.mxu0 0
    %1505 = vmatmul.mubr.bf16.gmra.mrb[0].mxu0 %v1423
    %v1506 = vpop.f32.mrb[0].mxu0
    %v1507 = vadd.f32 %v1429, %v1506
    %v1508 = vpop.f32.mrb[0].mxu0
    %v1509 = vadd.f32 %v1430, %v1508
    %v1510 = vpop.f32.mrb[0].mxu0
    %v1511 = vpop.f32.mrb[0].mxu0
    %1512 = vdwg.mxu0
    %v1513 = vxor.u32 %v1466, 2147483648
    %v1514 = vmul.f32 %v1513, 1.442695
    %v1515 = vpow.pop %v1514
    %v1516 = vadd.f32 %v1515, 1.0
    %v1517 = vrcp.pop %v1516
    %v1518 = vmul.f32 1.0, %v1517
    %v1519 = vxor.u32 %v1468, 2147483648
    %v1520 = vmul.f32 %v1519, 1.442695
    %v1521 = vpow.pop %v1520
    %v1522 = vadd.f32 %v1521, 1.0
    %v1523 = vrcp.pop %v1522
    %v1524 = vmul.f32 1.0, %v1523
    %v1525 = vtanh.pop %v1507
    %v1526 = vxor.u32 %v1509, 2147483648
    %v1527 = vmul.f32 %v1526, 1.442695
    %v1528 = vpow.pop %v1527
    %v1529 = vadd.f32 %v1528, 1.0
    %v1530 = vrcp.pop %v1529
    %v1531 = vmul.f32 1.0, %v1530
    %v1532 = vmul.f32 %v1524, %v1422
    %v1533 = vmul.f32 %v1518, %v1525
    %v1534 = vadd.f32 %v1532, %v1533
    %v1535 = vtanh.pop %v1534
    %v1536 = vmul.f32 %v1531, %v1535
    %vm1537 = vcmp.gt.s32.totalorder %v561, 6
    %v1538 = vsel %vm1537, %v1536, %v1421
    %v1539 = vsel %vm1537, %v1534, %v1422
    %v1540 = vpack.c.bf16 %v1538, %v1538
    %s1541 = smul.u32 7, 4
    %s1542 = smul.addr %s1541, 8
    %s1543 = scalar_lea.vmem [#allocation2], %s1542
    %v1544 = vld [vmem:[%s1543] sm:$0xff]
    %v1545 = vld [vmem:[%s1543 + $0x8] sm:$0xff]
    %v1546 = vld [vmem:[%s1543 + $0x10] sm:$0xff]
    %v1547 = vld [vmem:[%s1543 + $0x18] sm:$0xff]
    %1548 = vmatprep.subr.bf16.mxu0 %v666
    %1549 = vmatpush1.bf16.msra.mxu0 %v665
    %1550 = vmatprep.subr.bf16.mxu0 %v670
    %1551 = vmatpush1.bf16.msra.mxu0 %v669
    %1552 = vmatprep.subr.bf16.mxu0 %v674
    %1553 = vmatpush1.bf16.msra.mxu0 %v673
    %1554 = vmatprep.subr.bf16.mxu0 %v678
    %1555 = vmatpush1.bf16.msra.mxu0 %v677
    %1556 = vmatprep.subr.bf16.mxu0 %v682
    %1557 = vmatpush1.bf16.msra.mxu0 %v681
    %1558 = vmatprep.subr.bf16.mxu0 %v686
    %1559 = vmatpush1.bf16.msra.mxu0 %v685
    %1560 = vmatprep.subr.bf16.mxu0 %v690
    %1561 = vmatpush1.bf16.msra.mxu0 %v689
    %1562 = vmatprep.subr.bf16.mxu0 %v694
    %1563 = vmatpush1.bf16.msra.mxu0 %v693
    %1564 = vmatprep.subr.bf16.mxu0 0
    %1565 = vmatpush1.bf16.msra.mxu0 0
    %1566 = vmatprep.subr.bf16.mxu0 0
    %1567 = vmatpush1.bf16.msra.mxu0 0
    %1568 = vmatprep.subr.bf16.mxu0 0
    %1569 = vmatpush1.bf16.msra.mxu0 0
    %1570 = vmatprep.subr.bf16.mxu0 0
    %1571 = vmatpush1.bf16.msra.mxu0 0
    %1572 = vmatprep.subr.bf16.mxu0 0
    %1573 = vmatpush1.bf16.msra.mxu0 0
    %1574 = vmatprep.subr.bf16.mxu0 0
    %1575 = vmatpush1.bf16.msra.mxu0 0
    %1576 = vmatprep.subr.bf16.mxu0 0
    %1577 = vmatpush1.bf16.msra.mxu0 0
    %1578 = vmatprep.subr.bf16.mxu0 0
    %1579 = vmatpush1.bf16.msra.mxu0 0
    %1580 = vmatprep.mubr.bf16.mxu0 0
    %1581 = vmatmul.mubr.bf16.gmra.mrb[0].mxu0 %v1540
    %v1582 = vpop.f32.mrb[0].mxu0
    %v1583 = vadd.f32 %v1544, %v1582
    %v1584 = vpop.f32.mrb[0].mxu0
    %v1585 = vadd.f32 %v1545, %v1584
    %v1586 = vpop.f32.mrb[0].mxu0
    %v1587 = vpop.f32.mrb[0].mxu0
    %1588 = vdwg.mxu0
    %1589 = vmatprep.subr.bf16.mxu0 %v668
    %1590 = vmatpush1.bf16.msra.mxu0 %v667
    %1591 = vmatprep.subr.bf16.mxu0 %v672
    %1592 = vmatpush1.bf16.msra.mxu0 %v671
    %1593 = vmatprep.subr.bf16.mxu0 %v676
    %1594 = vmatpush1.bf16.msra.mxu0 %v675
    %1595 = vmatprep.subr.bf16.mxu0 %v680
    %1596 = vmatpush1.bf16.msra.mxu0 %v679
    %1597 = vmatprep.subr.bf16.mxu0 %v684
    %1598 = vmatpush1.bf16.msra.mxu0 %v683
    %1599 = vmatprep.subr.bf16.mxu0 %v688
    %1600 = vmatpush1.bf16.msra.mxu0 %v687
    %1601 = vmatprep.subr.bf16.mxu0 %v692
    %1602 = vmatpush1.bf16.msra.mxu0 %v691
    %1603 = vmatprep.subr.bf16.mxu0 %v696
    %1604 = vmatpush1.bf16.msra.mxu0 %v695
    %1605 = vmatprep.subr.bf16.mxu0 0
    %1606 = vmatpush1.bf16.msra.mxu0 0
    %1607 = vmatprep.subr.bf16.mxu0 0
    %1608 = vmatpush1.bf16.msra.mxu0 0
    %1609 = vmatprep.subr.bf16.mxu0 0
    %1610 = vmatpush1.bf16.msra.mxu0 0
    %1611 = vmatprep.subr.bf16.mxu0 0
    %1612 = vmatpush1.bf16.msra.mxu0 0
    %1613 = vmatprep.subr.bf16.mxu0 0
    %1614 = vmatpush1.bf16.msra.mxu0 0
    %1615 = vmatprep.subr.bf16.mxu0 0
    %1616 = vmatpush1.bf16.msra.mxu0 0
    %1617 = vmatprep.subr.bf16.mxu0 0
    %1618 = vmatpush1.bf16.msra.mxu0 0
    %1619 = vmatprep.subr.bf16.mxu0 0
    %1620 = vmatpush1.bf16.msra.mxu0 0
    %1621 = vmatprep.mubr.bf16.mxu0 0
    %1622 = vmatmul.mubr.bf16.gmra.mrb[0].mxu0 %v1540
    %v1623 = vpop.f32.mrb[0].mxu0
    %v1624 = vadd.f32 %v1546, %v1623
    %v1625 = vpop.f32.mrb[0].mxu0
    %v1626 = vadd.f32 %v1547, %v1625
    %v1627 = vpop.f32.mrb[0].mxu0
    %v1628 = vpop.f32.mrb[0].mxu0
    %1629 = vdwg.mxu0
    %v1630 = vxor.u32 %v1583, 2147483648
    %v1631 = vmul.f32 %v1630, 1.442695
    %v1632 = vpow.pop %v1631
    %v1633 = vadd.f32 %v1632, 1.0
    %v1634 = vrcp.pop %v1633
    %v1635 = vmul.f32 1.0, %v1634
    %v1636 = vxor.u32 %v1585, 2147483648
    %v1637 = vmul.f32 %v1636, 1.442695
    %v1638 = vpow.pop %v1637
    %v1639 = vadd.f32 %v1638, 1.0
    %v1640 = vrcp.pop %v1639
    %v1641 = vmul.f32 1.0, %v1640
    %v1642 = vtanh.pop %v1624
    %v1643 = vxor.u32 %v1626, 2147483648
    %v1644 = vmul.f32 %v1643, 1.442695
    %v1645 = vpow.pop %v1644
    %v1646 = vadd.f32 %v1645, 1.0
    %v1647 = vrcp.pop %v1646
    %v1648 = vmul.f32 1.0, %v1647
    %v1649 = vmul.f32 %v1641, %v1539
    %v1650 = vmul.f32 %v1635, %v1642
    %v1651 = vadd.f32 %v1649, %v1650
    %v1652 = vtanh.pop %v1651
    %v1653 = vmul.f32 %v1648, %v1652
    %vm1654 = vcmp.gt.s32.totalorder %v561, 7
    %v1655 = vsel %vm1654, %v1653, %v1538
    %v1656 = vpack.c.bf16 %v1655, %v1655
    %v1657 = vld [vmem:[#allocation9] sm:$0xf]
    %v1658 = vld [vmem:[#allocation9 + $0x4] sm:$0xf]
    %v1659 = vld [vmem:[#allocation9 + $0x8] sm:$0xf]
    %v1660 = vld [vmem:[#allocation9 + $0xc] sm:$0xf]
    %v1661 = vld [vmem:[#allocation9 + $0x10] sm:$0xf]
    %v1662 = vld [vmem:[#allocation9 + $0x14] sm:$0xf]
    %v1663 = vld [vmem:[#allocation9 + $0x18] sm:$0xf]
    %v1664 = vld [vmem:[#allocation9 + $0x1c] sm:$0xf]
    %v1665 = vld [vmem:[#allocation9 + $0x20] sm:$0xf]
    %v1666 = vld [vmem:[#allocation9 + $0x24] sm:$0xf]
    %v1667 = vld [vmem:[#allocation9 + $0x28] sm:$0xf]
    %v1668 = vld [vmem:[#allocation9 + $0x2c] sm:$0xf]
    %v1669 = vld [vmem:[#allocation9 + $0x30] sm:$0xf]
    %v1670 = vld [vmem:[#allocation9 + $0x34] sm:$0xf]
    %v1671 = vld [vmem:[#allocation9 + $0x38] sm:$0xf]
    %v1672 = vld [vmem:[#allocation9 + $0x3c] sm:$0xf]
    %v1673 = vld [vmem:[%s6] sm:$0x1]
    %v1675 = vlaneseq
    %v1676 = vshrl.u32 %v1675, 7
    %v1677 = vsub.s32 0, %v1676
    %v1678 = vrot.slane %v1673, %v1677
    %v1696 = vunpack.c.l.b16 %v1657
    %v1697 = vunpack.c.l.b16 %v1658
    %v1698 = vunpack.c.l.b16 %v1659
    %v1699 = vunpack.c.l.b16 %v1660
    %v1700 = vunpack.c.l.b16 %v1661
    %v1701 = vunpack.c.l.b16 %v1662
    %v1702 = vunpack.c.l.b16 %v1663
    %v1703 = vunpack.c.l.b16 %v1664
    %v1704 = vunpack.c.l.b16 %v1665
    %v1705 = vunpack.c.l.b16 %v1666
    %v1706 = vunpack.c.l.b16 %v1667
    %v1707 = vunpack.c.l.b16 %v1668
    %v1708 = vunpack.c.l.b16 %v1669
    %v1709 = vunpack.c.l.b16 %v1670
    %v1710 = vunpack.c.l.b16 %v1671
    %v1711 = vunpack.c.l.b16 %v1672
    %v1712 = vpack.c.b16 %v1697, %v1696
    %v1713 = vpack.c.b16 %v1699, %v1698
    %v1714 = vpack.c.b16 %v1701, %v1700
    %v1715 = vpack.c.b16 %v1703, %v1702
    %v1716 = vpack.c.b16 %v1705, %v1704
    %v1717 = vpack.c.b16 %v1707, %v1706
    %v1718 = vpack.c.b16 %v1709, %v1708
    %v1719 = vpack.c.b16 %v1711, %v1710
    %1728 = vmatprep.subr.bf16.mxu0 0
    %1729 = vmatpush1.bf16.msra.mxu0 %v1712
    %1730 = vmatprep.subr.bf16.mxu0 0
    %1731 = vmatpush1.bf16.msra.mxu0 %v1713
    %1732 = vmatprep.subr.bf16.mxu0 0
    %1733 = vmatpush1.bf16.msra.mxu0 %v1714
    %1734 = vmatprep.subr.bf16.mxu0 0
    %1735 = vmatpush1.bf16.msra.mxu0 %v1715
    %1736 = vmatprep.subr.bf16.mxu0 0
    %1737 = vmatpush1.bf16.msra.mxu0 %v1716
    %1738 = vmatprep.subr.bf16.mxu0 0
    %1739 = vmatpush1.bf16.msra.mxu0 %v1717
    %1740 = vmatprep.subr.bf16.mxu0 0
    %1741 = vmatpush1.bf16.msra.mxu0 %v1718
    %1742 = vmatprep.subr.bf16.mxu0 0
    %1743 = vmatpush1.bf16.msra.mxu0 %v1719
    %1744 = vmatprep.subr.bf16.mxu0 0
    %1745 = vmatpush1.bf16.msra.mxu0 0
    %1746 = vmatprep.subr.bf16.mxu0 0
    %1747 = vmatpush1.bf16.msra.mxu0 0
    %1748 = vmatprep.subr.bf16.mxu0 0
    %1749 = vmatpush1.bf16.msra.mxu0 0
    %1750 = vmatprep.subr.bf16.mxu0 0
    %1751 = vmatpush1.bf16.msra.mxu0 0
    %1752 = vmatprep.subr.bf16.mxu0 0
    %1753 = vmatpush1.bf16.msra.mxu0 0
    %1754 = vmatprep.subr.bf16.mxu0 0
    %1755 = vmatpush1.bf16.msra.mxu0 0
    %1756 = vmatprep.subr.bf16.mxu0 0
    %1757 = vmatpush1.bf16.msra.mxu0 0
    %1758 = vmatprep.subr.bf16.mxu0 0
    %1759 = vmatpush1.bf16.msra.mxu0 0
    %1760 = vmatprep.mubr.bf16.mxu0 0
    %1761 = vmatmul.mubr.bf16.gmra.mrb[0].mxu0 %v1656
    %v1762 = vpop.f32.mrb[0].mxu0
    %v1763 = vadd.f32 %v1678, %v1762
    %v1764 = vpop.f32.mrb[0].mxu0
    %v1765 = vpop.f32.mrb[0].mxu0
    %v1766 = vpop.f32.mrb[0].mxu0
    %1767 = vdwg.mxu0
    %v1768 = vmax.f32 %v1763, 0.0
    %v1769 = vpack.c.bf16 %v1768, %v1768
    %v1770 = vld [vmem:[#allocation11] sm:$0xf]
    %v1771 = vld [vmem:[#allocation11 + $0x4] sm:$0xf]
    %v1772 = vld [vmem:[#allocation11 + $0x8] sm:$0xf]
    %v1773 = vld [vmem:[#allocation11 + $0xc] sm:$0xf]
    %v1774 = vld [vmem:[#allocation11 + $0x10] sm:$0xf]
    %v1775 = vld [vmem:[#allocation11 + $0x14] sm:$0xf]
    %v1776 = vld [vmem:[#allocation11 + $0x18] sm:$0xf]
    %v1777 = vld [vmem:[#allocation11 + $0x1c] sm:$0xf]
    %v1778 = vld [vmem:[#allocation11 + $0x20] sm:$0xf]
    %v1779 = vld [vmem:[#allocation11 + $0x24] sm:$0xf]
    %v1780 = vld [vmem:[#allocation11 + $0x28] sm:$0xf]
    %v1781 = vld [vmem:[#allocation11 + $0x2c] sm:$0xf]
    %v1782 = vld [vmem:[#allocation11 + $0x30] sm:$0xf]
    %v1783 = vld [vmem:[#allocation11 + $0x34] sm:$0xf]
    %v1784 = vld [vmem:[#allocation11 + $0x38] sm:$0xf]
    %v1785 = vld [vmem:[#allocation11 + $0x3c] sm:$0xf]
    %v1786 = vld [vmem:[%s8] sm:$0x1]
    %v1788 = vlaneseq
    %v1789 = vshrl.u32 %v1788, 7
    %v1790 = vsub.s32 0, %v1789
    %v1791 = vrot.slane %v1786, %v1790
    %v1809 = vunpack.c.l.b16 %v1770
    %v1810 = vunpack.c.l.b16 %v1771
    %v1811 = vunpack.c.l.b16 %v1772
    %v1812 = vunpack.c.l.b16 %v1773
    %v1813 = vunpack.c.l.b16 %v1774
    %v1814 = vunpack.c.l.b16 %v1775
    %v1815 = vunpack.c.l.b16 %v1776
    %v1816 = vunpack.c.l.b16 %v1777
    %v1817 = vunpack.c.l.b16 %v1778
    %v1818 = vunpack.c.l.b16 %v1779
    %v1819 = vunpack.c.l.b16 %v1780
    %v1820 = vunpack.c.l.b16 %v1781
    %v1821 = vunpack.c.l.b16 %v1782
    %v1822 = vunpack.c.l.b16 %v1783
    %v1823 = vunpack.c.l.b16 %v1784
    %v1824 = vunpack.c.l.b16 %v1785
    %v1825 = vpack.c.b16 %v1810, %v1809
    %v1826 = vpack.c.b16 %v1812, %v1811
    %v1827 = vpack.c.b16 %v1814, %v1813
    %v1828 = vpack.c.b16 %v1816, %v1815
    %v1829 = vpack.c.b16 %v1818, %v1817
    %v1830 = vpack.c.b16 %v1820, %v1819
    %v1831 = vpack.c.b16 %v1822, %v1821
    %v1832 = vpack.c.b16 %v1824, %v1823
    %1841 = vmatprep.subr.bf16.mxu0 0
    %1842 = vmatpush1.bf16.msra.mxu0 %v1825
    %1843 = vmatprep.subr.bf16.mxu0 0
    %1844 = vmatpush1.bf16.msra.mxu0 %v1826
    %1845 = vmatprep.subr.bf16.mxu0 0
    %1846 = vmatpush1.bf16.msra.mxu0 %v1827
    %1847 = vmatprep.subr.bf16.mxu0 0
    %1848 = vmatpush1.bf16.msra.mxu0 %v1828
    %1849 = vmatprep.subr.bf16.mxu0 0
    %1850 = vmatpush1.bf16.msra.mxu0 %v1829
    %1851 = vmatprep.subr.bf16.mxu0 0
    %1852 = vmatpush1.bf16.msra.mxu0 %v1830
    %1853 = vmatprep.subr.bf16.mxu0 0
    %1854 = vmatpush1.bf16.msra.mxu0 %v1831
    %1855 = vmatprep.subr.bf16.mxu0 0
    %1856 = vmatpush1.bf16.msra.mxu0 %v1832
    %1857 = vmatprep.subr.bf16.mxu0 0
    %1858 = vmatpush1.bf16.msra.mxu0 0
    %1859 = vmatprep.subr.bf16.mxu0 0
    %1860 = vmatpush1.bf16.msra.mxu0 0
    %1861 = vmatprep.subr.bf16.mxu0 0
    %1862 = vmatpush1.bf16.msra.mxu0 0
    %1863 = vmatprep.subr.bf16.mxu0 0
    %1864 = vmatpush1.bf16.msra.mxu0 0
    %1865 = vmatprep.subr.bf16.mxu0 0
    %1866 = vmatpush1.bf16.msra.mxu0 0
    %1867 = vmatprep.subr.bf16.mxu0 0
    %1868 = vmatpush1.bf16.msra.mxu0 0
    %1869 = vmatprep.subr.bf16.mxu0 0
    %1870 = vmatpush1.bf16.msra.mxu0 0
    %1871 = vmatprep.subr.bf16.mxu0 0
    %1872 = vmatpush1.bf16.msra.mxu0 0
    %1873 = vmatprep.mubr.bf16.mxu0 0
    %1874 = vmatmul.mubr.bf16.gmra.mrb[0].mxu0 %v1769
    %v1875 = vpop.f32.mrb[0].mxu0
    %v1876 = vadd.f32 %v1791, %v1875
    %v1877 = vpop.f32.mrb[0].mxu0
    %v1878 = vpop.f32.mrb[0].mxu0
    %v1879 = vpop.f32.mrb[0].mxu0
    %1880 = vdwg.mxu0
    %1881 = vst [vmem:[#allocation12] sm:$0xff] %v1876
    // Predicated region
    $region58: #{tpu_custom_call.1} parent=1 // pred_check
      _
    $region59: #{tpu_custom_call.1} parent=1 // pred_check_branch
      %1883 = sbr.rel (0) target = $region61
    $region60: #{tpu_custom_call.1} parent=1 // pred_region
      %s1885 = ssub.s32 128, 128
      %1886 = vsyncadd [#allocation5], %s1885
      %s1888 = sshll.u32 [#allocation12], 4
      %s1889 = int_to_ptr.vmem [resolvable:$true] %s1888
      %1891 = dma.vmem_to_hbm [thread:$0]  %s1889, 128, %s9, [#allocation5]
    $region61: #{tpu_custom_call.1} parent=1 // pred_fallthru
      _
    // Predicated region
    $region62: #{tpu_custom_call.1} parent=1 // pred_check
      _
    $region63: #{tpu_custom_call.1} parent=1 // pred_check_branch
      %1893 = sbr.rel (0) target = $region65
    $region64: #{tpu_custom_call.1} parent=1 // pred_region
      %1894 = dma.done [#allocation5], 128
    $region65: #{tpu_custom_call.1} parent=1 // pred_fallthru
      _
    %1895 = vsyncpa [#allocation4], 1
    %1896 = vsyncpa [#allocation7], 1
    %1897 = vsyncpa [#allocation10], 1
    %1898 = vsyncpa [#allocation5], 1

</llo_original>
